<compile_context>
chip_gen: v5e
topology: v5e:2x2
jax: 0.10.0
libtpu: 0.0.40
codegen_flags: <defaults>
</compile_context>

<pallas_src>
import functools

import jax
import jax.numpy as jnp
from jax.experimental import pallas as pl
from jax.experimental.pallas import tpu as pltpu


def _round_up(x, m):
    return ((x + m - 1) // m) * m


def _pad2(x, rows, cols):
    return jnp.pad(x, ((0, rows - x.shape[0]), (0, cols - x.shape[1])))


# ----------------------------------------------------------------------------
# Kernel 1: GNN + noise + auxiliary classifier CE + mean pool + graph_to_hidden
# ----------------------------------------------------------------------------
def graph_kernel(a_ref, x_ref, wg_ref, bg_ref, noise_ref,
                 waux_ref, baux_ref, labels_ref, wh_ref, bh_ref,
                 aux_logits_ref, aux_nll_ref, ghid_ref,
                 *, n_real, c_real):
    # GNN layer: h = relu(A @ X @ Wg + bg)                           (Np, Gp)
    ax = jnp.dot(a_ref[...], x_ref[...], preferred_element_type=jnp.float32)
    h = jnp.dot(ax, wg_ref[...], preferred_element_type=jnp.float32) + bg_ref[...]
    h = jnp.maximum(h, 0.0)

    # graph_embeddings = graph_embeddings + randn_like(...) * 0.01
    # TODO(synk): noise could be generated in-kernel (pltpu.prng_seed +
    #             pltpu.stateful_normal) to drop one HBM input stream.
    h = h + noise_ref[...] * jnp.float32(0.01)

    # Zero padded node rows so the mean pool over the real N nodes is exact.
    row = jax.lax.broadcasted_iota(jnp.int32, h.shape, 0)
    h = jnp.where(row < n_real, h, 0.0)

    # Auxiliary classifier logits (lane-dense padded class dim)      (Np, Cp)
    logits = jnp.dot(h, waux_ref[...],
                     preferred_element_type=jnp.float32) + baux_ref[...]
    aux_logits_ref[...] = logits

    # Per-node cross-entropy; padded classes masked out of the LSE.
    col = jax.lax.broadcasted_iota(jnp.int32, logits.shape, 1)
    masked = jnp.where(col < c_real, logits, -1e30)
    m = jnp.max(masked, axis=-1, keepdims=True)
    lse = m + jnp.log(jnp.sum(jnp.exp(masked - m), axis=-1, keepdims=True))
    picked = jnp.sum(jnp.where(col == labels_ref[...], logits, 0.0),
                     axis=-1, keepdims=True)
    aux_nll_ref[...] = lse - picked

    # global_mean_pool over the real nodes, then graph_to_hidden projection.
    pooled = jnp.sum(h, axis=0, keepdims=True) * jnp.float32(1.0 / n_real)
    ghid_ref[...] = (jnp.dot(pooled, wh_ref[...],
                             preferred_element_type=jnp.float32) + bh_ref[...])


def graph_forward(A, X, Wg, bg, noise, Waux, baux, aux_labels, Wh, bh):
    N, F = X.shape
    G, C, H = Wg.shape[1], Waux.shape[1], Wh.shape[1]

    Np = _round_up(N, 8)        # node dim on sublanes
    Nl = _round_up(N, 128)      # node dim when it sits on lanes (A's columns)
    Fp = _round_up(F, 128)
    Gp = _round_up(G, 128)
    Cp = _round_up(C, 128)
    Hp = _round_up(H, 128)

    A_p = _pad2(A, Np, Nl)
    X_p = _pad2(X, Nl, Fp)
    Wg_p = _pad2(Wg, Fp, Gp)
    bg_p = _pad2(bg.reshape(1, -1), 1, Gp)
    noise_p = _pad2(noise, Np, Gp)
    Waux_p = _pad2(Waux, Gp, Cp)
    baux_p = _pad2(baux.reshape(1, -1), 1, Cp)
    labels_p = jnp.pad(aux_labels.reshape(-1, 1).astype(jnp.int32),
                       ((0, Np - N), (0, 0)), constant_values=-1)
    Wh_p = _pad2(Wh, Gp, Hp)
    bh_p = _pad2(bh.reshape(1, -1), 1, Hp)

    vmem = pl.BlockSpec(memory_space=pltpu.MemorySpace.VMEM)
    aux_logits_p, aux_nll_p, ghid_p = pl.pallas_call(
        functools.partial(graph_kernel, n_real=N, c_real=C),
        out_shape=(
            jax.ShapeDtypeStruct((Np, Cp), jnp.float32),   # aux logits (padded)
            jax.ShapeDtypeStruct((Np, 1), jnp.float32),    # per-node aux nll
            jax.ShapeDtypeStruct((1, Hp), jnp.float32),    # graph_to_hidden(mean pool)
        ),
        in_specs=[vmem] * 10,
        out_specs=(vmem, vmem, vmem),
    )(A_p, X_p, Wg_p, bg_p, noise_p, Waux_p, baux_p, labels_p, Wh_p, bh_p)

    return aux_logits_p[:N, :C], aux_nll_p[:N, 0], ghid_p   # ghid kept padded (1, Hp)


# ----------------------------------------------------------------------------
# Kernel 2: + graph embedding, tied LM head (bf16, tiled), online-LSE shifted CE
# ----------------------------------------------------------------------------
def lm_head_kernel(embeds_ref, ghid_ref, wte_t_ref, labels_ref,
                   logits_ref, nll_ref,
                   m_scr, l_scr, p_scr,
                   *, v_real, tv):
    vi = pl.program_id(1)

    @pl.when(vi == 0)
    def _init():
        m_scr[...] = jnp.full(m_scr.shape, -1e30, dtype=jnp.float32)
        l_scr[...] = jnp.zeros(l_scr.shape, dtype=jnp.float32)
        p_scr[...] = jnp.zeros(p_scr.shape, dtype=jnp.float32)

    # x = wte(input_ids) + graph_embedding_expanded                  (TS, Hp)
    x = embeds_ref[...] + ghid_ref[...]

    # Tied LM head: one lane-dense bf16 MXU matmul per (seq, vocab) tile.
    logits = jnp.dot(x.astype(jnp.bfloat16), wte_t_ref[...],
                     preferred_element_type=jnp.float32)             # (TS, TV)
    logits_ref[...] = logits

    # Online log-sum-exp across vocab tiles; padded vocab columns masked.
    col = vi * tv + jax.lax.broadcasted_iota(jnp.int32, logits.shape, 1)
    masked = jnp.where(col < v_real, logits, -1e30)

    m_prev = m_scr[...]
    m_new = jnp.maximum(m_prev, jnp.max(masked, axis=-1, keepdims=True))
    alpha = jnp.exp(m_prev - m_new)
    l_scr[...] = alpha * l_scr[...] + jnp.sum(jnp.exp(masked - m_new),
                                              axis=-1, keepdims=True)
    m_scr[...] = m_new

    # Accumulate the picked (label) logit; labels < 0 (shifted-out last token,
    # padding, ignore_index-style) never match any column and contribute 0.
    hit = col == labels_ref[...]
    p_scr[...] += jnp.sum(jnp.where(hit, logits, 0.0), axis=-1, keepdims=True)

    @pl.when(vi == pl.num_programs(1) - 1)
    def _finalize():
        nll_ref[...] = (m_scr[...] + jnp.log(l_scr[...])) - p_scr[...]


def lm_head_forward(inputs_embeds, graph_hidden_p, wte, labels):
    B, S, H = inputs_embeds.shape
    V = wte.shape[0]
    Hp = graph_hidden_p.shape[1]
    tokens = B * S

    # Tile sizes: multiples of 256 feed the v6e/v7x MXU edge; clamped for tiny
    # problems.  (TS, TV) f32 logits tiles stay small enough that the
    # double-buffered working set is far below v7x's 64 MiB VMEM.
    TS = 256 if tokens >= 256 else 128
    TV = min(512, _round_up(V, 128))
    tokens_p = _round_up(tokens, TS)
    Vp = _round_up(V, TV)
    nseq, nvoc = tokens_p // TS, Vp // TV

    # Flatten tokens and pad everything lane-dense.
    x = _pad2(inputs_embeds.reshape(tokens, H).astype(jnp.float32), tokens_p, Hp)

    # Tied LM head weight: pre-transposed to (H, V), padded, bf16 (f32 accum).
    wte_t = _pad2(wte.T, Hp, Vp).astype(jnp.bfloat16)

    # GPT-2 shift done in the wrapper: position t is scored against label t+1;
    # the last position of each sequence and all padding get label -1 (ignored).
    shifted = jnp.concatenate(
        [labels[:, 1:], jnp.full((B, 1), -1, dtype=labels.dtype)], axis=1)
    shifted_flat = jnp.pad(shifted.reshape(tokens, 1).astype(jnp.int32),
                           ((0, tokens_p - tokens), (0, 0)), constant_values=-1)

    kernel = functools.partial(lm_head_kernel, v_real=V, tv=TV)

    logits_p, nll_p = pl.pallas_call(
        kernel,
        out_shape=(
            jax.ShapeDtypeStruct((tokens_p, Vp), jnp.float32),   # LM logits (padded)
            jax.ShapeDtypeStruct((tokens_p, 1), jnp.float32),    # per-token shifted nll
        ),
        grid_spec=pltpu.PrefetchScalarGridSpec(
            num_scalar_prefetch=0,
            grid=(nseq, nvoc),
            in_specs=[
                pl.BlockSpec((TS, Hp), lambda si, vi: (si, 0)),    # token embeds
                pl.BlockSpec((1, Hp), lambda si, vi: (0, 0)),      # graph embedding
                pl.BlockSpec((Hp, TV), lambda si, vi: (0, vi)),    # tied head (bf16)
                pl.BlockSpec((TS, 1), lambda si, vi: (si, 0)),     # shifted labels
            ],
            out_specs=[
                pl.BlockSpec((TS, TV), lambda si, vi: (si, vi)),   # logits tile
                pl.BlockSpec((TS, 1), lambda si, vi: (si, 0)),     # per-token nll
            ],
            scratch_shapes=[pltpu.VMEM((TS, 1), jnp.float32)] * 3,
        ),
        compiler_params=pltpu.CompilerParams(
            dimension_semantics=("parallel", "arbitrary"),
            vmem_limit_bytes=32 * 1024 * 1024),
        cost_estimate=pl.CostEstimate(
            flops=2 * tokens_p * Hp * Vp,
            transcendentals=tokens_p * Vp,
            bytes_accessed=(tokens_p * Hp * 4 + Hp * Vp * 2
                            + tokens_p * Vp * 4 + tokens_p * 4),
        ),
    )(x, graph_hidden_p, wte_t, shifted_flat)

    lm_logits = logits_p[:tokens, :V].reshape(B, S, V)
    nll = nll_p[:tokens, 0]

    valid = (shifted.reshape(tokens) >= 0).astype(jnp.float32)
    lm_loss = jnp.sum(nll * valid) / jnp.maximum(jnp.sum(valid), 1.0)
    return lm_logits, lm_loss


# ----------------------------------------------------------------------------
# Full GraphToTextModel forward (glue in JAX, hot paths in Pallas)
# ----------------------------------------------------------------------------
def graph_to_text_forward(params, graph_data, lm_inputs, noise, aux_labels):
    A, X = graph_data
    input_ids, labels = lm_inputs
    H = params['Wh'].shape[1]

    aux_logits, aux_nll, graph_hidden_p = graph_forward(
        A, X, params['Wg'], params['bg'], noise,
        params['Waux'], params['baux'], aux_labels,
        params['Wh'], params['bh'])
    aux_loss = jnp.mean(aux_nll)

    # wte embedding lookup (gather glue left to XLA).
    inputs_embeds = jnp.take(params['wte'], input_ids, axis=0)      # (B, S, H)

    lm_logits, lm_loss = lm_head_forward(inputs_embeds, graph_hidden_p,
                                         params['wte'], labels)

    total_loss = lm_loss + aux_loss          # lm_outputs.loss += auxiliary_loss
    graph_hidden = graph_hidden_p[:, :H]
    return total_loss, lm_logits, aux_logits, graph_hidden


if __name__ == "__main__":
    # Small, deterministic shapes
    N, F = 16, 8          # nodes, node-feature dim
    G = 32                # gnn_model.output_dim
    H = 32                # hidden_dim
    C = 8                 # num_classes (auxiliary classifier)
    B, S, V = 2, 8, 64    # batch, seq_len, vocab

    key = jax.random.PRNGKey(0)
    keys = jax.random.split(key, 9)

    # Graph data: dense normalized adjacency + node features
    A = (jax.random.uniform(keys[0], (N, N)) < 0.3).astype(jnp.float32)
    A = A + jnp.eye(N, dtype=jnp.float32)
    A = A / jnp.sum(A, axis=1, keepdims=True)
    X = jax.random.normal(keys[1], (N, F), dtype=jnp.float32)

    params = {
        'Wg':   jax.random.normal(keys[2], (F, G), dtype=jnp.float32) * 0.1,
        'bg':   jnp.zeros((1, G), dtype=jnp.float32),
        'Waux': jax.random.normal(keys[3], (G, C), dtype=jnp.float32) * 0.1,
        'baux': jnp.zeros((1, C), dtype=jnp.float32),
        'Wh':   jax.random.normal(keys[4], (G, H), dtype=jnp.float32) * 0.1,
        'bh':   jnp.zeros((1, H), dtype=jnp.float32),
        'wte':  jax.random.normal(keys[5], (V, H), dtype=jnp.float32) * 0.02,
    }

    input_ids = jax.random.randint(keys[6], (B, S), 0, V, dtype=jnp.int32)
    labels = input_ids                                     # LM labels = inputs
    noise = jax.random.normal(keys[7], (N, G), dtype=jnp.float32)
    aux_labels = jax.random.randint(keys[8], (N, 1), 0, C, dtype=jnp.int32)

    fwd = jax.jit(graph_to_text_forward)
    total_loss, lm_logits, aux_logits, graph_hidden = fwd(
        params, (A, X), (input_ids, labels), noise, aux_labels)
    jax.block_until_ready((total_loss, lm_logits, aux_logits, graph_hidden))

    assert lm_logits.shape == (B, S, V)
    assert aux_logits.shape == (N, C)
    assert graph_hidden.shape == (1, H)
    assert jnp.isfinite(total_loss)
    print("KERNEL_OK")
</pallas_src>

<mosaic_0001>
module attributes {stable_mosaic.version = 11 : i64} {
  func.func @graph_kernel(%arg0: memref<16x128xf32, #tpu.memory_space<vmem>>, %arg1: memref<128x128xf32, #tpu.memory_space<vmem>>, %arg2: memref<128x128xf32, #tpu.memory_space<vmem>>, %arg3: memref<1x128xf32, #tpu.memory_space<vmem>>, %arg4: memref<16x128xf32, #tpu.memory_space<vmem>>, %arg5: memref<128x128xf32, #tpu.memory_space<vmem>>, %arg6: memref<1x128xf32, #tpu.memory_space<vmem>>, %arg7: memref<16x1xi32, #tpu.memory_space<vmem>>, %arg8: memref<128x128xf32, #tpu.memory_space<vmem>>, %arg9: memref<1x128xf32, #tpu.memory_space<vmem>>, %arg10: memref<16x128xf32, #tpu.memory_space<vmem>>, %arg11: memref<16x1xf32, #tpu.memory_space<vmem>>, %arg12: memref<1x128xf32, #tpu.memory_space<vmem>>) attributes {dimension_semantics = [], scalar_prefetch = 0 : i64, scratch_operands = 0 : i64, tpu.core_type = #tpu.core_type<tc>} {
    %c0 = arith.constant 0 : index
    %c0_0 = arith.constant 0 : index
    %0 = vector.load %arg0[%c0, %c0_0] : memref<16x128xf32, #tpu.memory_space<vmem>>, vector<16x128xf32>
    %c0_1 = arith.constant 0 : index
    %c0_2 = arith.constant 0 : index
    %1 = vector.load %arg1[%c0_1, %c0_2] : memref<128x128xf32, #tpu.memory_space<vmem>>, vector<128x128xf32>
    %cst = arith.constant dense<0.000000e+00> : vector<16x128xf32>
    %2 = tpu.matmul %0, %1, %cst {dimension_numbers = #tpu.dot_dimension_numbers<[1], [0], [0], [1], [0, 0, 1, 1], [], []>} : vector<16x128xf32>, vector<128x128xf32>, vector<16x128xf32> -> vector<16x128xf32>
    %c0_3 = arith.constant 0 : index
    %c0_4 = arith.constant 0 : index
    %3 = vector.load %arg2[%c0_3, %c0_4] : memref<128x128xf32, #tpu.memory_space<vmem>>, vector<128x128xf32>
    %cst_5 = arith.constant dense<0.000000e+00> : vector<16x128xf32>
    %4 = tpu.matmul %2, %3, %cst_5 {dimension_numbers = #tpu.dot_dimension_numbers<[1], [0], [0], [1], [0, 0, 1, 1], [], []>} : vector<16x128xf32>, vector<128x128xf32>, vector<16x128xf32> -> vector<16x128xf32>
    %c0_6 = arith.constant 0 : index
    %c0_7 = arith.constant 0 : index
    %5 = vector.load %arg3[%c0_6, %c0_7] : memref<1x128xf32, #tpu.memory_space<vmem>>, vector<1x128xf32>
    %6 = vector.broadcast %5 : vector<1x128xf32> to vector<16x128xf32>
    %7 = arith.addf %4, %6 : vector<16x128xf32>
    %cst_8 = arith.constant 0.000000e+00 : f32
    %8 = vector.broadcast %cst_8 : f32 to vector<16x128xf32>
    %9 = arith.maximumf %7, %8 : vector<16x128xf32>
    %c0_9 = arith.constant 0 : index
    %c0_10 = arith.constant 0 : index
    %10 = vector.load %arg4[%c0_9, %c0_10] : memref<16x128xf32, #tpu.memory_space<vmem>>, vector<16x128xf32>
    %cst_11 = arith.constant 0.00999999977 : f32
    %11 = vector.broadcast %cst_11 : f32 to vector<16x128xf32>
    %12 = arith.mulf %10, %11 : vector<16x128xf32>
    %13 = arith.addf %9, %12 : vector<16x128xf32>
    %14 = tpu.iota {dimensions = array<i32: 0>} : vector<16x128xi32>
    %c16_i32 = arith.constant 16 : i32
    %15 = vector.broadcast %c16_i32 : i32 to vector<16x128xi32>
    %16 = arith.cmpi slt, %14, %15 : vector<16x128xi32>
    %cst_12 = arith.constant 0.000000e+00 : f32
    %17 = vector.broadcast %cst_12 : f32 to vector<16x128xf32>
    %18 = arith.select %16, %13, %17 : vector<16x128xi1>, vector<16x128xf32>
    %c0_13 = arith.constant 0 : index
    %c0_14 = arith.constant 0 : index
    %19 = vector.load %arg5[%c0_13, %c0_14] : memref<128x128xf32, #tpu.memory_space<vmem>>, vector<128x128xf32>
    %cst_15 = arith.constant dense<0.000000e+00> : vector<16x128xf32>
    %20 = tpu.matmul %18, %19, %cst_15 {dimension_numbers = #tpu.dot_dimension_numbers<[1], [0], [0], [1], [0, 0, 1, 1], [], []>} : vector<16x128xf32>, vector<128x128xf32>, vector<16x128xf32> -> vector<16x128xf32>
    %c0_16 = arith.constant 0 : index
    %c0_17 = arith.constant 0 : index
    %21 = vector.load %arg6[%c0_16, %c0_17] : memref<1x128xf32, #tpu.memory_space<vmem>>, vector<1x128xf32>
    %22 = vector.broadcast %21 : vector<1x128xf32> to vector<16x128xf32>
    %23 = arith.addf %20, %22 : vector<16x128xf32>
    %c0_18 = arith.constant 0 : index
    %c0_19 = arith.constant 0 : index
    %24 = vector.load %arg10[%c0_18, %c0_19] : memref<16x128xf32, #tpu.memory_space<vmem>>, vector<16x128xf32>
    tpu.vector_store %arg10[%c0_18, %c0_19], %23 {strides = array<i32>} : memref<16x128xf32, #tpu.memory_space<vmem>>, vector<16x128xf32>,
    %25 = tpu.iota {dimensions = array<i32: 1>} : vector<16x128xi32>
    %c8_i32 = arith.constant 8 : i32
    %26 = vector.broadcast %c8_i32 : i32 to vector<16x128xi32>
    %27 = arith.cmpi slt, %25, %26 : vector<16x128xi32>
    %cst_20 = arith.constant -1.000000e+30 : f32
    %28 = vector.broadcast %cst_20 : f32 to vector<16x128xf32>
    %29 = arith.select %27, %23, %28 : vector<16x128xi1>, vector<16x128xf32>
    %cst_21 = arith.constant dense<0xFF800000> : vector<16xf32>
    %30 = vector.multi_reduction <maximumf>, %29, %cst_21 [1] : vector<16x128xf32> to vector<16xf32>
    %31 = vector.shape_cast %30 : vector<16xf32> to vector<16x1xf32>
    %32 = vector.broadcast %31 : vector<16x1xf32> to vector<16x128xf32>
    %33 = arith.subf %29, %32 : vector<16x128xf32>
    %34 = math.exp %33 : vector<16x128xf32>
    %cst_22 = arith.constant dense<0.000000e+00> : vector<16xf32>
    %35 = vector.multi_reduction <add>, %34, %cst_22 [1] : vector<16x128xf32> to vector<16xf32>
    %36 = vector.shape_cast %35 : vector<16xf32> to vector<16x1xf32>
    %37 = math.log %36 : vector<16x1xf32>
    %38 = arith.addf %31, %37 : vector<16x1xf32>
    %c0_23 = arith.constant 0 : index
    %c0_24 = arith.constant 0 : index
    %39 = vector.load %arg7[%c0_23, %c0_24] : memref<16x1xi32, #tpu.memory_space<vmem>>, vector<16x1xi32>
    %40 = vector.broadcast %39 : vector<16x1xi32> to vector<16x128xi32>
    %41 = arith.cmpi eq, %25, %40 : vector<16x128xi32>
    %cst_25 = arith.constant 0.000000e+00 : f32
    %42 = vector.broadcast %cst_25 : f32 to vector<16x128xf32>
    %43 = arith.select %41, %23, %42 : vector<16x128xi1>, vector<16x128xf32>
    %cst_26 = arith.constant dense<0.000000e+00> : vector<16xf32>
    %44 = vector.multi_reduction <add>, %43, %cst_26 [1] : vector<16x128xf32> to vector<16xf32>
    %45 = vector.shape_cast %44 : vector<16xf32> to vector<16x1xf32>
    %46 = arith.subf %38, %45 : vector<16x1xf32>
    %c0_27 = arith.constant 0 : index
    %c0_28 = arith.constant 0 : index
    %47 = vector.load %arg11[%c0_27, %c0_28] : memref<16x1xf32, #tpu.memory_space<vmem>>, vector<16x1xf32>
    tpu.vector_store %arg11[%c0_27, %c0_28], %46 {strides = array<i32>} : memref<16x1xf32, #tpu.memory_space<vmem>>, vector<16x1xf32>,
    %cst_29 = arith.constant dense<0.000000e+00> : vector<128xf32>
    %48 = vector.multi_reduction <add>, %18, %cst_29 [0] : vector<16x128xf32> to vector<128xf32>
    %49 = vector.shape_cast %48 : vector<128xf32> to vector<1x128xf32>
    %cst_30 = arith.constant 6.250000e-02 : f32
    %50 = vector.broadcast %cst_30 : f32 to vector<1x128xf32>
    %51 = arith.mulf %49, %50 : vector<1x128xf32>
    %c0_31 = arith.constant 0 : index
    %c0_32 = arith.constant 0 : index
    %52 = vector.load %arg8[%c0_31, %c0_32] : memref<128x128xf32, #tpu.memory_space<vmem>>, vector<128x128xf32>
    %cst_33 = arith.constant dense<0.000000e+00> : vector<1x128xf32>
    %53 = tpu.matmul %51, %52, %cst_33 {dimension_numbers = #tpu.dot_dimension_numbers<[1], [0], [0], [1], [0, 0, 1, 1], [], []>} : vector<1x128xf32>, vector<128x128xf32>, vector<1x128xf32> -> vector<1x128xf32>
    %c0_34 = arith.constant 0 : index
    %c0_35 = arith.constant 0 : index
    %54 = vector.load %arg9[%c0_34, %c0_35] : memref<1x128xf32, #tpu.memory_space<vmem>>, vector<1x128xf32>
    %55 = arith.addf %53, %54 : vector<1x128xf32>
    %c0_36 = arith.constant 0 : index
    %c0_37 = arith.constant 0 : index
    %56 = vector.load %arg12[%c0_36, %c0_37] : memref<1x128xf32, #tpu.memory_space<vmem>>, vector<1x128xf32>
    tpu.vector_store %arg12[%c0_36, %c0_37], %55 {strides = array<i32>} : memref<1x128xf32, #tpu.memory_space<vmem>>, vector<1x128xf32>,
    return
  }
}

module attributes {stable_mosaic.version = 11 : i64} {
  func.func @lm_head_kernel(%arg0: i32, %arg1: i32, %arg2: memref<128x128xf32, #tpu.memory_space<vmem>>, %arg3: memref<1x128xf32, #tpu.memory_space<vmem>>, %arg4: memref<128x128xbf16, #tpu.memory_space<vmem>>, %arg5: memref<128x1xi32, #tpu.memory_space<vmem>>, %arg6: memref<128x128xf32, #tpu.memory_space<vmem>>, %arg7: memref<128x1xf32, #tpu.memory_space<vmem>>, %arg8: memref<128x1xf32, #tpu.memory_space<vmem>>, %arg9: memref<128x1xf32, #tpu.memory_space<vmem>>, %arg10: memref<128x1xf32, #tpu.memory_space<vmem>>) attributes {dimension_semantics = [#tpu.dimension_semantics<parallel>, #tpu.dimension_semantics<arbitrary>], iteration_bounds = array<i64: 1, 1>, scalar_prefetch = 0 : i64, scratch_operands = 3 : i64, tpu.core_type = #tpu.core_type<tc>, window_params = [{transform_indices = @transform_0, window_bounds = array<i64: 128, 128>}, {pipeline_mode = #tpu.pipeline_mode<synchronous>, transform_indices = @transform_1, window_bounds = array<i64: 1, 128>}, {transform_indices = @transform_2, window_bounds = array<i64: 128, 128>}, {transform_indices = @transform_3, window_bounds = array<i64: 128, 1>}, {transform_indices = @transform_4, window_bounds = array<i64: 128, 128>}, {transform_indices = @transform_5, window_bounds = array<i64: 128, 1>}]} {
    %c0_i32 = arith.constant 0 : i32
    %0 = arith.cmpi eq, %arg1, %c0_i32 : i32
    %1 = arith.extui %0 : i1 to i32
    %c0_i32_0 = arith.constant 0 : i32
    %2 = arith.cmpi ne, %1, %c0_i32_0 : i32
    scf.if %2 {
      %cst_29 = arith.constant -1.000000e+30 : f32
      %48 = vector.broadcast %cst_29 : f32 to vector<128x1xf32>
      %c0_30 = arith.constant 0 : index
      %c0_31 = arith.constant 0 : index
      %49 = vector.load %arg8[%c0_30, %c0_31] : memref<128x1xf32, #tpu.memory_space<vmem>>, vector<128x1xf32>
      tpu.vector_store %arg8[%c0_30, %c0_31], %48 {strides = array<i32>} : memref<128x1xf32, #tpu.memory_space<vmem>>, vector<128x1xf32>,
      %cst_32 = arith.constant 0.000000e+00 : f32
      %50 = vector.broadcast %cst_32 : f32 to vector<128x1xf32>
      %c0_33 = arith.constant 0 : index
      %c0_34 = arith.constant 0 : index
      %51 = vector.load %arg9[%c0_33, %c0_34] : memref<128x1xf32, #tpu.memory_space<vmem>>, vector<128x1xf32>
      tpu.vector_store %arg9[%c0_33, %c0_34], %50 {strides = array<i32>} : memref<128x1xf32, #tpu.memory_space<vmem>>, vector<128x1xf32>,
      %cst_35 = arith.constant 0.000000e+00 : f32
      %52 = vector.broadcast %cst_35 : f32 to vector<128x1xf32>
      %c0_36 = arith.constant 0 : index
      %c0_37 = arith.constant 0 : index
      %53 = vector.load %arg10[%c0_36, %c0_37] : memref<128x1xf32, #tpu.memory_space<vmem>>, vector<128x1xf32>
      tpu.vector_store %arg10[%c0_36, %c0_37], %52 {strides = array<i32>} : memref<128x1xf32, #tpu.memory_space<vmem>>, vector<128x1xf32>,
    } else {
    }
    %c0 = arith.constant 0 : index
    %c0_1 = arith.constant 0 : index
    %3 = vector.load %arg2[%c0, %c0_1] : memref<128x128xf32, #tpu.memory_space<vmem>>, vector<128x128xf32>
    %c0_2 = arith.constant 0 : index
    %c0_3 = arith.constant 0 : index
    %4 = vector.load %arg3[%c0_2, %c0_3] : memref<1x128xf32, #tpu.memory_space<vmem>>, vector<1x128xf32>
    %5 = vector.broadcast %4 : vector<1x128xf32> to vector<128x128xf32>
    %6 = arith.addf %3, %5 : vector<128x128xf32>
    %7 = arith.truncf %6 : vector<128x128xf32> to vector<128x128xbf16>
    %c0_4 = arith.constant 0 : index
    %c0_5 = arith.constant 0 : index
    %8 = vector.load %arg4[%c0_4, %c0_5] : memref<128x128xbf16, #tpu.memory_space<vmem>>, vector<128x128xbf16>
    %cst = arith.constant dense<0.000000e+00> : vector<128x128xf32>
    %9 = tpu.matmul %7, %8, %cst {dimension_numbers = #tpu.dot_dimension_numbers<[1], [0], [0], [1], [0, 0, 1, 1], [], []>} : vector<128x128xbf16>, vector<128x128xbf16>, vector<128x128xf32> -> vector<128x128xf32>
    %c0_6 = arith.constant 0 : index
    %c0_7 = arith.constant 0 : index
    %10 = vector.load %arg6[%c0_6, %c0_7] : memref<128x128xf32, #tpu.memory_space<vmem>>, vector<128x128xf32>
    tpu.vector_store %arg6[%c0_6, %c0_7], %9 {strides = array<i32>} : memref<128x128xf32, #tpu.memory_space<vmem>>, vector<128x128xf32>,
    %c128_i32 = arith.constant 128 : i32
    %11 = arith.muli %arg1, %c128_i32 : i32
    %12 = tpu.iota {dimensions = array<i32: 1>} : vector<128x128xi32>
    %13 = vector.broadcast %11 : i32 to vector<128x128xi32>
    %14 = arith.addi %13, %12 : vector<128x128xi32>
    %c64_i32 = arith.constant 64 : i32
    %15 = vector.broadcast %c64_i32 : i32 to vector<128x128xi32>
    %16 = arith.cmpi slt, %14, %15 : vector<128x128xi32>
    %cst_8 = arith.constant -1.000000e+30 : f32
    %17 = vector.broadcast %cst_8 : f32 to vector<128x128xf32>
    %18 = arith.select %16, %9, %17 : vector<128x128xi1>, vector<128x128xf32>
    %c0_9 = arith.constant 0 : index
    %c0_10 = arith.constant 0 : index
    %19 = vector.load %arg8[%c0_9, %c0_10] : memref<128x1xf32, #tpu.memory_space<vmem>>, vector<128x1xf32>
    %cst_11 = arith.constant dense<0xFF800000> : vector<128xf32>
    %20 = vector.multi_reduction <maximumf>, %18, %cst_11 [1] : vector<128x128xf32> to vector<128xf32>
    %21 = vector.shape_cast %20 : vector<128xf32> to vector<128x1xf32>
    %22 = arith.maximumf %19, %21 : vector<128x1xf32>
    %23 = arith.subf %19, %22 : vector<128x1xf32>
    %24 = math.exp %23 : vector<128x1xf32>
    %c0_12 = arith.constant 0 : index
    %c0_13 = arith.constant 0 : index
    %25 = vector.load %arg9[%c0_12, %c0_13] : memref<128x1xf32, #tpu.memory_space<vmem>>, vector<128x1xf32>
    %26 = arith.mulf %24, %25 : vector<128x1xf32>
    %27 = vector.broadcast %22 : vector<128x1xf32> to vector<128x128xf32>
    %28 = arith.subf %18, %27 : vector<128x128xf32>
    %29 = math.exp %28 : vector<128x128xf32>
    %cst_14 = arith.constant dense<0.000000e+00> : vector<128xf32>
    %30 = vector.multi_reduction <add>, %29, %cst_14 [1] : vector<128x128xf32> to vector<128xf32>
    %31 = vector.shape_cast %30 : vector<128xf32> to vector<128x1xf32>
    %32 = arith.addf %26, %31 : vector<128x1xf32>
    %c0_15 = arith.constant 0 : index
    %c0_16 = arith.constant 0 : index
    %33 = vector.load %arg9[%c0_15, %c0_16] : memref<128x1xf32, #tpu.memory_space<vmem>>, vector<128x1xf32>
    tpu.vector_store %arg9[%c0_15, %c0_16], %32 {strides = array<i32>} : memref<128x1xf32, #tpu.memory_space<vmem>>, vector<128x1xf32>,
    %c0_17 = arith.constant 0 : index
    %c0_18 = arith.constant 0 : index
    %34 = vector.load %arg8[%c0_17, %c0_18] : memref<128x1xf32, #tpu.memory_space<vmem>>, vector<128x1xf32>
    tpu.vector_store %arg8[%c0_17, %c0_18], %22 {strides = array<i32>} : memref<128x1xf32, #tpu.memory_space<vmem>>, vector<128x1xf32>,
    %c0_19 = arith.constant 0 : index
    %c0_20 = arith.constant 0 : index
    %35 = vector.load %arg5[%c0_19, %c0_20] : memref<128x1xi32, #tpu.memory_space<vmem>>, vector<128x1xi32>
    %36 = vector.broadcast %35 : vector<128x1xi32> to vector<128x128xi32>
    %37 = arith.cmpi eq, %14, %36 : vector<128x128xi32>
    %c0_21 = arith.constant 0 : index
    %c0_22 = arith.constant 0 : index
    %38 = vector.load %arg10[%c0_21, %c0_22] : memref<128x1xf32, #tpu.memory_space<vmem>>, vector<128x1xf32>
    %cst_23 = arith.constant 0.000000e+00 : f32
    %39 = vector.broadcast %cst_23 : f32 to vector<128x128xf32>
    %40 = arith.select %37, %9, %39 : vector<128x128xi1>, vector<128x128xf32>
    %cst_24 = arith.constant dense<0.000000e+00> : vector<128xf32>
    %41 = vector.multi_reduction <add>, %40, %cst_24 [1] : vector<128x128xf32> to vector<128xf32>
    %42 = vector.shape_cast %41 : vector<128xf32> to vector<128x1xf32>
    %43 = arith.addf %38, %42 : vector<128x1xf32>
    %c0_25 = arith.constant 0 : index
    %c0_26 = arith.constant 0 : index
    %44 = vector.load %arg10[%c0_25, %c0_26] : memref<128x1xf32, #tpu.memory_space<vmem>>, vector<128x1xf32>
    tpu.vector_store %arg10[%c0_25, %c0_26], %43 {strides = array<i32>} : memref<128x1xf32, #tpu.memory_space<vmem>>, vector<128x1xf32>,
    %c0_i32_27 = arith.constant 0 : i32
    %45 = arith.cmpi eq, %arg1, %c0_i32_27 : i32
    %46 = arith.extui %45 : i1 to i32
    %c0_i32_28 = arith.constant 0 : i32
    %47 = arith.cmpi ne, %46, %c0_i32_28 : i32
    scf.if %47 {
      %c0_29 = arith.constant 0 : index
      %c0_30 = arith.constant 0 : index
      %48 = vector.load %arg8[%c0_29, %c0_30] : memref<128x1xf32, #tpu.memory_space<vmem>>, vector<128x1xf32>
      %c0_31 = arith.constant 0 : index
      %c0_32 = arith.constant 0 : index
      %49 = vector.load %arg9[%c0_31, %c0_32] : memref<128x1xf32, #tpu.memory_space<vmem>>, vector<128x1xf32>
      %50 = math.log %49 : vector<128x1xf32>
      %51 = arith.addf %48, %50 : vector<128x1xf32>
      %c0_33 = arith.constant 0 : index
      %c0_34 = arith.constant 0 : index
      %52 = vector.load %arg10[%c0_33, %c0_34] : memref<128x1xf32, #tpu.memory_space<vmem>>, vector<128x1xf32>
      %53 = arith.subf %51, %52 : vector<128x1xf32>
      %c0_35 = arith.constant 0 : index
      %c0_36 = arith.constant 0 : index
      %54 = vector.load %arg7[%c0_35, %c0_36] : memref<128x1xf32, #tpu.memory_space<vmem>>, vector<128x1xf32>
      tpu.vector_store %arg7[%c0_35, %c0_36], %53 {strides = array<i32>} : memref<128x1xf32, #tpu.memory_space<vmem>>, vector<128x1xf32>,
    } else {
    }
    return
  }
  func.func @transform_0(%arg0: i32, %arg1: i32) -> (i32, i32) {
    %c0_i32 = arith.constant 0 : i32
    %c0_i32_0 = arith.constant 0 : i32
    return %arg0, %c0_i32 : i32, i32
  }
  func.func @transform_1(%arg0: i32, %arg1: i32) -> (i32, i32) {
    %c0_i32 = arith.constant 0 : i32
    %c0_i32_0 = arith.constant 0 : i32
    %c0_i32_1 = arith.constant 0 : i32
    return %c0_i32, %c0_i32_0 : i32, i32
  }
  func.func @transform_2(%arg0: i32, %arg1: i32) -> (i32, i32) {
    %c0_i32 = arith.constant 0 : i32
    %c0_i32_0 = arith.constant 0 : i32
    return %c0_i32, %arg1 : i32, i32
  }
  func.func @transform_3(%arg0: i32, %arg1: i32) -> (i32, i32) {
    %c0_i32 = arith.constant 0 : i32
    %c0_i32_0 = arith.constant 0 : i32
    return %arg0, %c0_i32 : i32, i32
  }
  func.func @transform_4(%arg0: i32, %arg1: i32) -> (i32, i32) {
    %c0_i32 = arith.constant 0 : i32
    return %arg0, %arg1 : i32, i32
  }
  func.func @transform_5(%arg0: i32, %arg1: i32) -> (i32, i32) {
    %c0_i32 = arith.constant 0 : i32
    %c0_i32_0 = arith.constant 0 : i32
    return %arg0, %c0_i32 : i32, i32
  }
}

</mosaic_0001>

<llo_original>
// kernel: graph_to_text_forward.2
$region0: #{graph_to_text_forward.2}
  #allocation0 [shape = 'u32[]', space=smem, size = 0x4, offset = 0x4, fixed_abs, tag = 'smem constant byte address 0x4 - core index']
  #allocation1 [shape = 'u32[72,128]{1,0:T(1,128)}', space=vmem, size = 0x9000, scoped, tag = 'internal scratch']
  %s0 = inlined_call_operand.vmem [shape: f32[16,128], index: 0, kind: input, shape index: {}]
  %s1 = inlined_call_operand.vmem [shape: f32[128,128], index: 1, kind: input, shape index: {}]
  %s2 = inlined_call_operand.vmem [shape: f32[128,128], index: 2, kind: input, shape index: {}]
  %s3 = inlined_call_operand.vmem [shape: f32[1,128], index: 3, kind: input, shape index: {}]
  %s4 = inlined_call_operand.vmem [shape: f32[16,128], index: 4, kind: input, shape index: {}]
  %s5 = inlined_call_operand.vmem [shape: f32[128,128], index: 5, kind: input, shape index: {}]
  %s6 = inlined_call_operand.vmem [shape: f32[1,128], index: 6, kind: input, shape index: {}]
  %s7 = inlined_call_operand.vmem [shape: s32[16,1], index: 7, kind: input, shape index: {}]
  %s8 = inlined_call_operand.vmem [shape: f32[128,128], index: 8, kind: input, shape index: {}]
  %s9 = inlined_call_operand.vmem [shape: f32[1,128], index: 9, kind: input, shape index: {}]
  %s10 = inlined_call_operand.vmem [shape: f32[16,128], index: 10, kind: output, shape index: {0}]
  %s11 = inlined_call_operand.vmem [shape: f32[16,1], index: 11, kind: output, shape index: {1}]
  %s12 = inlined_call_operand.vmem [shape: f32[1,128], index: 12, kind: output, shape index: {2}]
  %13 = xla_tuple %s10, %s11, %s12
  %s14 = sld [smem:[#allocation0]]
  $region66: #{graph_to_text_forward.2} parent=0
    _
  %s16 = ssub.s32 1, %s14
  %s17 = scalar_select 0, %s16, %s14
  // Predicated region
  $region2: #{graph_to_text_forward.2} parent=0 // pred_check
    _
  $region3: #{graph_to_text_forward.2} parent=0 // pred_check_branch
    %19 = sbr.rel (0) target = $region5
  $region4: #{graph_to_text_forward.2} parent=0 // pred_region
    _
  $region5: #{graph_to_text_forward.2} parent=0 // pred_fallthru
    _
  // Predicated region
  $region6: #{graph_to_text_forward.2} parent=0 // pred_check
    _
  $region7: #{graph_to_text_forward.2} parent=0 // pred_check_branch
    %21 = sbr.rel (0) target = $region9
  $region8: #{graph_to_text_forward.2} parent=0 // pred_region
    _
  $region9: #{graph_to_text_forward.2} parent=0 // pred_fallthru
    _
  // Predicated region
  $region10: #{graph_to_text_forward.2} parent=0 // pred_check
    _
  $region11: #{graph_to_text_forward.2} parent=0 // pred_check_branch
    %23 = sbr.rel (0) target = $region13
  $region12: #{graph_to_text_forward.2} parent=0 // pred_region
    _
  $region13: #{graph_to_text_forward.2} parent=0 // pred_fallthru
    _
  // Predicated region
  $region14: #{graph_to_text_forward.2} parent=0 // pred_check
    _
  $region15: #{graph_to_text_forward.2} parent=0 // pred_check_branch
    %25 = sbr.rel (0) target = $region17
  $region16: #{graph_to_text_forward.2} parent=0 // pred_region
    _
  $region17: #{graph_to_text_forward.2} parent=0 // pred_fallthru
    _
  // Predicated region
  $region18: #{graph_to_text_forward.2} parent=0 // pred_check
    _
  $region19: #{graph_to_text_forward.2} parent=0 // pred_check_branch
    %27 = sbr.rel (0) target = $region21
  $region20: #{graph_to_text_forward.2} parent=0 // pred_region
    _
  $region21: #{graph_to_text_forward.2} parent=0 // pred_fallthru
    _
  // Predicated region
  $region22: #{graph_to_text_forward.2} parent=0 // pred_check
    _
  $region23: #{graph_to_text_forward.2} parent=0 // pred_check_branch
    %29 = sbr.rel (0) target = $region25
  $region24: #{graph_to_text_forward.2} parent=0 // pred_region
    _
  $region25: #{graph_to_text_forward.2} parent=0 // pred_fallthru
    _
  // Predicated region
  $region26: #{graph_to_text_forward.2} parent=0 // pred_check
    _
  $region27: #{graph_to_text_forward.2} parent=0 // pred_check_branch
    %31 = sbr.rel (0) target = $region29
  $region28: #{graph_to_text_forward.2} parent=0 // pred_region
    _
  $region29: #{graph_to_text_forward.2} parent=0 // pred_fallthru
    _
  // Predicated region
  $region30: #{graph_to_text_forward.2} parent=0 // pred_check
    _
  $region31: #{graph_to_text_forward.2} parent=0 // pred_check_branch
    %33 = sbr.rel (0) target = $region33
  $region32: #{graph_to_text_forward.2} parent=0 // pred_region
    _
  $region33: #{graph_to_text_forward.2} parent=0 // pred_fallthru
    _
  // Predicated region
  $region34: #{graph_to_text_forward.2} parent=0 // pred_check
    _
  $region35: #{graph_to_text_forward.2} parent=0 // pred_check_branch
    %35 = sbr.rel (0) target = $region37
  $region36: #{graph_to_text_forward.2} parent=0 // pred_region
    _
  $region37: #{graph_to_text_forward.2} parent=0 // pred_fallthru
    _
  // Predicated region
  $region38: #{graph_to_text_forward.2} parent=0 // pred_check
    _
  $region39: #{graph_to_text_forward.2} parent=0 // pred_check_branch
    %37 = sbr.rel (0) target = $region41
  $region40: #{graph_to_text_forward.2} parent=0 // pred_region
    _
  $region41: #{graph_to_text_forward.2} parent=0 // pred_fallthru
    _
  %v38 = vld [vmem:[%s0] sm:$0xff]
  %v39 = vld [vmem:[%s0 + $0x8] sm:$0xff]
  %v40 = vld [vmem:[%s1] sm:$0xff]
  %v41 = vld [vmem:[%s1 + $0x8] sm:$0xff]
  %v42 = vld [vmem:[%s1 + $0x10] sm:$0xff]
  %v43 = vld [vmem:[%s1 + $0x18] sm:$0xff]
  %v44 = vld [vmem:[%s1 + $0x20] sm:$0xff]
  %v45 = vld [vmem:[%s1 + $0x28] sm:$0xff]
  %v46 = vld [vmem:[%s1 + $0x30] sm:$0xff]
  %v47 = vld [vmem:[%s1 + $0x38] sm:$0xff]
  %v48 = vld [vmem:[%s1 + $0x40] sm:$0xff]
  %v49 = vld [vmem:[%s1 + $0x48] sm:$0xff]
  %v50 = vld [vmem:[%s1 + $0x50] sm:$0xff]
  %v51 = vld [vmem:[%s1 + $0x58] sm:$0xff]
  %v52 = vld [vmem:[%s1 + $0x60] sm:$0xff]
  %v53 = vld [vmem:[%s1 + $0x68] sm:$0xff]
  %v54 = vld [vmem:[%s1 + $0x70] sm:$0xff]
  %v55 = vld [vmem:[%s1 + $0x78] sm:$0xff]
  %56 = vmatpush.msra.mxu0 %v55
  %57 = vmatpush.msra.mxu0 %v54
  %58 = vmatpush.msra.mxu0 %v53
  %59 = vmatpush.msra.mxu0 %v52
  %60 = vmatpush.msra.mxu0 %v51
  %61 = vmatpush.msra.mxu0 %v50
  %62 = vmatpush.msra.mxu0 %v49
  %63 = vmatpush.msra.mxu0 %v48
  %64 = vmatpush.msra.mxu0 %v47
  %65 = vmatpush.msra.mxu0 %v46
  %66 = vmatpush.msra.mxu0 %v45
  %67 = vmatpush.msra.mxu0 %v44
  %68 = vmatpush.msra.mxu0 %v43
  %69 = vmatpush.msra.mxu0 %v42
  %70 = vmatpush.msra.mxu0 %v41
  %71 = vmatpush.msra.mxu0 %v40
  %72 = vmatmul.f32.gmra.mxu0 %v38
  %v73 = vpop.f32.mrf.mxu0
  %v74 = vadd.f32 0.0, %v73
  %75 = vmatmul.f32.gmra.mxu0 %v39
  %v76 = vpop.f32.mrf.mxu0
  %v77 = vadd.f32 0.0, %v76
  %78 = vdwg.mxu0
  %v79 = vld [vmem:[%s2] sm:$0xff]
  %v80 = vld [vmem:[%s2 + $0x8] sm:$0xff]
  %v81 = vld [vmem:[%s2 + $0x10] sm:$0xff]
  %v82 = vld [vmem:[%s2 + $0x18] sm:$0xff]
  %v83 = vld [vmem:[%s2 + $0x20] sm:$0xff]
  %v84 = vld [vmem:[%s2 + $0x28] sm:$0xff]
  %v85 = vld [vmem:[%s2 + $0x30] sm:$0xff]
  %v86 = vld [vmem:[%s2 + $0x38] sm:$0xff]
  %v87 = vld [vmem:[%s2 + $0x40] sm:$0xff]
  %v88 = vld [vmem:[%s2 + $0x48] sm:$0xff]
  %v89 = vld [vmem:[%s2 + $0x50] sm:$0xff]
  %v90 = vld [vmem:[%s2 + $0x58] sm:$0xff]
  %v91 = vld [vmem:[%s2 + $0x60] sm:$0xff]
  %v92 = vld [vmem:[%s2 + $0x68] sm:$0xff]
  %v93 = vld [vmem:[%s2 + $0x70] sm:$0xff]
  %v94 = vld [vmem:[%s2 + $0x78] sm:$0xff]
  %v95 = vld [vmem:[%s3] sm:$0x1]
  %v97 = vperm.slane %v95, 0
  %99 = vmatpush.msra.mxu0 %v94
  %100 = vmatpush.msra.mxu0 %v93
  %101 = vmatpush.msra.mxu0 %v92
  %102 = vmatpush.msra.mxu0 %v91
  %103 = vmatpush.msra.mxu0 %v90
  %104 = vmatpush.msra.mxu0 %v89
  %105 = vmatpush.msra.mxu0 %v88
  %106 = vmatpush.msra.mxu0 %v87
  %107 = vmatpush.msra.mxu0 %v86
  %108 = vmatpush.msra.mxu0 %v85
  %109 = vmatpush.msra.mxu0 %v84
  %110 = vmatpush.msra.mxu0 %v83
  %111 = vmatpush.msra.mxu0 %v82
  %112 = vmatpush.msra.mxu0 %v81
  %113 = vmatpush.msra.mxu0 %v80
  %114 = vmatpush.msra.mxu0 %v79
  %115 = vmatmul.f32.gmra.mxu0 %v74
  %v116 = vpop.f32.mrf.mxu0
  %v117 = vadd.f32 %v97, %v116
  %118 = vmatmul.f32.gmra.mxu0 %v77
  %v119 = vpop.f32.mrf.mxu0
  %v120 = vadd.f32 %v97, %v119
  %121 = vdwg.mxu0
  %v122 = vmax.f32 %v117, 0.0
  %v123 = vmax.f32 %v120, 0.0
  %v124 = vld [vmem:[%s4] sm:$0xff]
  %v125 = vld [vmem:[%s4 + $0x8] sm:$0xff]
  %v126 = vmul.f32 %v124, 0.01
  %v127 = vmul.f32 %v125, 0.01
  %v128 = vadd.f32 %v122, %v126
  %v129 = vadd.f32 %v123, %v127
  %v130 = vlaneseq
  %v131 = vshrl.u32 %v130, 7
  %v132 = vadd.s32 %v131, 8
  %vm133 = vcmp.lt.s32.totalorder %v131, 16
  %vm134 = vcmp.lt.s32.totalorder %v132, 16
  %v135 = vsel %vm133, %v128, 0.0
  %v136 = vsel %vm134, %v129, 0.0
  %v137 = vld [vmem:[%s5] sm:$0xff]
  %v138 = vld [vmem:[%s5 + $0x8] sm:$0xff]
  %v139 = vld [vmem:[%s5 + $0x10] sm:$0xff]
  %v140 = vld [vmem:[%s5 + $0x18] sm:$0xff]
  %v141 = vld [vmem:[%s5 + $0x20] sm:$0xff]
  %v142 = vld [vmem:[%s5 + $0x28] sm:$0xff]
  %v143 = vld [vmem:[%s5 + $0x30] sm:$0xff]
  %v144 = vld [vmem:[%s5 + $0x38] sm:$0xff]
  %v145 = vld [vmem:[%s5 + $0x40] sm:$0xff]
  %v146 = vld [vmem:[%s5 + $0x48] sm:$0xff]
  %v147 = vld [vmem:[%s5 + $0x50] sm:$0xff]
  %v148 = vld [vmem:[%s5 + $0x58] sm:$0xff]
  %v149 = vld [vmem:[%s5 + $0x60] sm:$0xff]
  %v150 = vld [vmem:[%s5 + $0x68] sm:$0xff]
  %v151 = vld [vmem:[%s5 + $0x70] sm:$0xff]
  %v152 = vld [vmem:[%s5 + $0x78] sm:$0xff]
  %v153 = vld [vmem:[%s6] sm:$0x1]
  %v155 = vperm.slane %v153, 0
  %157 = vmatpush.msra.mxu0 %v152
  %158 = vmatpush.msra.mxu0 %v151
  %159 = vmatpush.msra.mxu0 %v150
  %160 = vmatpush.msra.mxu0 %v149
  %161 = vmatpush.msra.mxu0 %v148
  %162 = vmatpush.msra.mxu0 %v147
  %163 = vmatpush.msra.mxu0 %v146
  %164 = vmatpush.msra.mxu0 %v145
  %165 = vmatpush.msra.mxu0 %v144
  %166 = vmatpush.msra.mxu0 %v143
  %167 = vmatpush.msra.mxu0 %v142
  %168 = vmatpush.msra.mxu0 %v141
  %169 = vmatpush.msra.mxu0 %v140
  %170 = vmatpush.msra.mxu0 %v139
  %171 = vmatpush.msra.mxu0 %v138
  %172 = vmatpush.msra.mxu0 %v137
  %173 = vmatmul.f32.gmra.mxu0 %v135
  %v174 = vpop.f32.mrf.mxu0
  %v175 = vadd.f32 %v155, %v174
  %176 = vmatmul.f32.gmra.mxu0 %v136
  %v177 = vpop.f32.mrf.mxu0
  %v178 = vadd.f32 %v155, %v177
  %179 = vdwg.mxu0
  %180 = vst [vmem:[%s10] sm:$0xff] %v175
  %181 = vst [vmem:[%s10 + $0x8] sm:$0xff] %v178
  %v182 = vlaneseq
  %v183 = vand.u32 %v182, 127
  %vm184 = vcmp.lt.s32.totalorder %v183, 8
  %v185 = vsel %vm184, %v175, -1e+30
  %v186 = vsel %vm184, %v178, -1e+30
  %187 = vmax.xlane.f32.xlu0 %v185
  %v188 = vpop.xlane.xlu0 %187
  %189 = vmax.xlane.f32.xlu0 %v186
  %v190 = vpop.xlane.xlu0 %189
  %v191 = vsub.f32 %v185, %v188
  %v192 = vsub.f32 %v186, %v190
  %v193 = vmul.f32 %v191, 1.442695
  %v194 = vpow.pop %v193
  %v195 = vmul.f32 %v192, 1.442695
  %v196 = vpow.pop %v195
  %197 = vadd.xlane.f32.xlu0 %v194
  %v198 = vpop.xlane.xlu0 %197
  %199 = vadd.xlane.f32.xlu0 %v196
  %v200 = vpop.xlane.xlu0 %199
  %v201 = vlog2.pop %v198
  %v202 = vmul.f32 %v201, 0.6931472
  %v203 = vlog2.pop %v200
  %v204 = vmul.f32 %v203, 0.6931472
  %v205 = vadd.f32 %v188, %v202
  %v206 = vadd.f32 %v190, %v204
  %v207 = vld [vmem:[%s7] sm:$0xff]
  %v208 = vld [vmem:[%s7 + $0x8] sm:$0xff]
  %209 = vset.pattern.permute.xlu0 0
  %210 = vperm.xlu0 %209, %v207
  %v211 = vpop.permute.xlu0 %210
  %212 = vset.pattern.permute.xlu0 0
  %213 = vperm.xlu0 %212, %v208
  %v214 = vpop.permute.xlu0 %213
  %vm215 = vcmp.eq.s32.totalorder %v183, %v211
  %vm216 = vcmp.eq.s32.totalorder %v183, %v214
  %v217 = vsel %vm215, %v175, 0.0
  %v218 = vsel %vm216, %v178, 0.0
  %219 = vadd.xlane.f32.xlu0 %v217
  %v220 = vpop.xlane.xlu0 %219
  %221 = vadd.xlane.f32.xlu0 %v218
  %v222 = vpop.xlane.xlu0 %221
  %v223 = vsub.f32 %v205, %v220
  %v224 = vsub.f32 %v206, %v222
  %vm225 = vcmask 7168
  %226 = vst.msk [vmem:[%s11] sm:$0xff] %vm225, %v223
  %227 = vst.msk [vmem:[%s11 + $0x8] sm:$0xff] %vm225, %v224
  %v228 = vadd.f32 %v135, %v136
  %v229 = vrot.slane %v228, 4
  %v230 = vadd.f32 %v228, %v229
  %v231 = vrot.slane %v230, 2
  %v232 = vadd.f32 %v230, %v231
  %v233 = vrot.slane %v232, 1
  %v234 = vadd.f32 %v232, %v233
  %v235 = vmul.f32 %v234, 0.0625
  %v236 = vld [vmem:[%s8] sm:$0xff]
  %v237 = vld [vmem:[%s8 + $0x8] sm:$0xff]
  %v238 = vld [vmem:[%s8 + $0x10] sm:$0xff]
  %v239 = vld [vmem:[%s8 + $0x18] sm:$0xff]
  %v240 = vld [vmem:[%s8 + $0x20] sm:$0xff]
  %v241 = vld [vmem:[%s8 + $0x28] sm:$0xff]
  %v242 = vld [vmem:[%s8 + $0x30] sm:$0xff]
  %v243 = vld [vmem:[%s8 + $0x38] sm:$0xff]
  %v244 = vld [vmem:[%s8 + $0x40] sm:$0xff]
  %v245 = vld [vmem:[%s8 + $0x48] sm:$0xff]
  %v246 = vld [vmem:[%s8 + $0x50] sm:$0xff]
  %v247 = vld [vmem:[%s8 + $0x58] sm:$0xff]
  %v248 = vld [vmem:[%s8 + $0x60] sm:$0xff]
  %v249 = vld [vmem:[%s8 + $0x68] sm:$0xff]
  %v250 = vld [vmem:[%s8 + $0x70] sm:$0xff]
  %v251 = vld [vmem:[%s8 + $0x78] sm:$0xff]
  %v252 = vld [vmem:[%s9] sm:$0x1]
  %253 = vmatpush.msra.mxu0 %v251
  %254 = vmatpush.msra.mxu0 %v250
  %255 = vmatpush.msra.mxu0 %v249
  %256 = vmatpush.msra.mxu0 %v248
  %257 = vmatpush.msra.mxu0 %v247
  %258 = vmatpush.msra.mxu0 %v246
  %259 = vmatpush.msra.mxu0 %v245
  %260 = vmatpush.msra.mxu0 %v244
  %261 = vmatpush.msra.mxu0 %v243
  %262 = vmatpush.msra.mxu0 %v242
  %263 = vmatpush.msra.mxu0 %v241
  %264 = vmatpush.msra.mxu0 %v240
  %265 = vmatpush.msra.mxu0 %v239
  %266 = vmatpush.msra.mxu0 %v238
  %267 = vmatpush.msra.mxu0 %v237
  %268 = vmatpush.msra.mxu0 %v236
  %269 = vmatmul.f32.gmra.mxu0 %v235
  %v270 = vpop.f32.mrf.mxu0
  %v271 = vadd.f32 %v252, %v270
  %272 = vdwg.mxu0
  %273 = vst [vmem:[%s12] sm:$0x1] %v271
  // Predicated region
  $region42: #{graph_to_text_forward.2} parent=0 // pred_check
    _
  $region43: #{graph_to_text_forward.2} parent=0 // pred_check_branch
    %275 = sbr.rel (0) target = $region45
  $region44: #{graph_to_text_forward.2} parent=0 // pred_region
    _
  $region45: #{graph_to_text_forward.2} parent=0 // pred_fallthru
    _
  // Predicated region
  $region46: #{graph_to_text_forward.2} parent=0 // pred_check
    _
  $region47: #{graph_to_text_forward.2} parent=0 // pred_check_branch
    %277 = sbr.rel (0) target = $region49
  $region48: #{graph_to_text_forward.2} parent=0 // pred_region
    _
  $region49: #{graph_to_text_forward.2} parent=0 // pred_fallthru
    _
  // Predicated region
  $region50: #{graph_to_text_forward.2} parent=0 // pred_check
    _
  $region51: #{graph_to_text_forward.2} parent=0 // pred_check_branch
    %279 = sbr.rel (0) target = $region53
  $region52: #{graph_to_text_forward.2} parent=0 // pred_region
    _
  $region53: #{graph_to_text_forward.2} parent=0 // pred_fallthru
    _
  // Predicated region
  $region54: #{graph_to_text_forward.2} parent=0 // pred_check
    _
  $region55: #{graph_to_text_forward.2} parent=0 // pred_check_branch
    %281 = sbr.rel (0) target = $region57
  $region56: #{graph_to_text_forward.2} parent=0 // pred_region
    _
  $region57: #{graph_to_text_forward.2} parent=0 // pred_fallthru
    _
  // Predicated region
  $region58: #{graph_to_text_forward.2} parent=0 // pred_check
    _
  $region59: #{graph_to_text_forward.2} parent=0 // pred_check_branch
    %283 = sbr.rel (0) target = $region61
  $region60: #{graph_to_text_forward.2} parent=0 // pred_region
    _
  $region61: #{graph_to_text_forward.2} parent=0 // pred_fallthru
    _
  // Predicated region
  $region62: #{graph_to_text_forward.2} parent=0 // pred_check
    _
  $region63: #{graph_to_text_forward.2} parent=0 // pred_check_branch
    %285 = sbr.rel (0) target = $region65
  $region64: #{graph_to_text_forward.2} parent=0 // pred_region
    _
  $region65: #{graph_to_text_forward.2} parent=0 // pred_fallthru
    _

// kernel: graph_to_text_forward.3
$region0: #{graph_to_text_forward.3}
  #allocation0 [shape = 'u32[]', space=smem, size = 0x4, offset = 0x4, fixed_abs, tag = 'smem constant byte address 0x4 - core index']
  #allocation1 [shape = 'u32[72,128]{1,0:T(1,128)}', space=vmem, size = 0x9000, scoped, tag = 'internal scratch']
  #allocation2 [shape = 'f32[128,1]{1,0:T(8,128)}', space=vmem, size = 0x10000, scoped, tag = 'scratch operand']
  #allocation3 [shape = 'f32[128,1]{1,0:T(8,128)}', space=vmem, size = 0x10000, scoped, tag = 'scratch operand']
  #allocation4 [shape = 'f32[128,1]{1,0:T(8,128)}', space=vmem, size = 0x10000, scoped, tag = 'scratch operand']
  %s0 = inlined_call_operand.vmem [shape: f32[128,128], index: 0, kind: input, shape index: {}]
  %s1 = inlined_call_operand.vmem [shape: f32[1,128], index: 1, kind: input, shape index: {}]
  %s2 = inlined_call_operand.vmem [shape: bf16[128,128], index: 2, kind: input, shape index: {}]
  %s3 = inlined_call_operand.vmem [shape: s32[128,1], index: 3, kind: input, shape index: {}]
  %s4 = inlined_call_operand.vmem [shape: f32[128,128], index: 4, kind: output, shape index: {0}]
  %s5 = inlined_call_operand.vmem [shape: f32[128,1], index: 5, kind: output, shape index: {1}]
  %6 = xla_tuple %s4, %s5
  %s7 = sld [smem:[#allocation0]]
  $region42: #{graph_to_text_forward.3} parent=0
    _
  %s9 = ssub.s32 1, %s7
  %s10 = scalar_select 0, %s9, %s7
  // Predicated region
  $region2: #{graph_to_text_forward.3} parent=0 // pred_check
    _
  $region3: #{graph_to_text_forward.3} parent=0 // pred_check_branch
    %12 = sbr.rel (0) target = $region5
  $region4: #{graph_to_text_forward.3} parent=0 // pred_region
    _
  $region5: #{graph_to_text_forward.3} parent=0 // pred_fallthru
    _
  // Predicated region
  $region6: #{graph_to_text_forward.3} parent=0 // pred_check
    _
  $region7: #{graph_to_text_forward.3} parent=0 // pred_check_branch
    %14 = sbr.rel (0) target = $region9
  $region8: #{graph_to_text_forward.3} parent=0 // pred_region
    _
  $region9: #{graph_to_text_forward.3} parent=0 // pred_fallthru
    _
  // Predicated region
  $region10: #{graph_to_text_forward.3} parent=0 // pred_check
    _
  $region11: #{graph_to_text_forward.3} parent=0 // pred_check_branch
    %16 = sbr.rel (0) target = $region13
  $region12: #{graph_to_text_forward.3} parent=0 // pred_region
    _
  $region13: #{graph_to_text_forward.3} parent=0 // pred_fallthru
    _
  // Predicated region
  $region14: #{graph_to_text_forward.3} parent=0 // pred_check
    _
  $region15: #{graph_to_text_forward.3} parent=0 // pred_check_branch
    %18 = sbr.rel (0) target = $region17
  $region16: #{graph_to_text_forward.3} parent=0 // pred_region
    _
  $region17: #{graph_to_text_forward.3} parent=0 // pred_fallthru
    _
  %p19 = scmp.eq.s32.totalorder 0, 0
  // Predicated region
  $region18: #{graph_to_text_forward.3} parent=0 // pred_check
    %p20 = pneg %p19
  $region19: #{graph_to_text_forward.3} parent=0 // pred_check_branch
    %22 = sbr.rel (%p20) target = $region21
  $region20: #{graph_to_text_forward.3} parent=0 // pred_region
    %vm23 = vcmask 7168
    %24 = vst.msk [vmem:[#allocation2] sm:$0xff] %vm23, -1e+30
    %25 = vst.msk [vmem:[#allocation2 + $0x8] sm:$0xff] %vm23, -1e+30
    %26 = vst.msk [vmem:[#allocation2 + $0x10] sm:$0xff] %vm23, -1e+30
    %27 = vst.msk [vmem:[#allocation2 + $0x18] sm:$0xff] %vm23, -1e+30
    %28 = vst.msk [vmem:[#allocation2 + $0x20] sm:$0xff] %vm23, -1e+30
    %29 = vst.msk [vmem:[#allocation2 + $0x28] sm:$0xff] %vm23, -1e+30
    %30 = vst.msk [vmem:[#allocation2 + $0x30] sm:$0xff] %vm23, -1e+30
    %31 = vst.msk [vmem:[#allocation2 + $0x38] sm:$0xff] %vm23, -1e+30
    %32 = vst.msk [vmem:[#allocation2 + $0x40] sm:$0xff] %vm23, -1e+30
    %33 = vst.msk [vmem:[#allocation2 + $0x48] sm:$0xff] %vm23, -1e+30
    %34 = vst.msk [vmem:[#allocation2 + $0x50] sm:$0xff] %vm23, -1e+30
    %35 = vst.msk [vmem:[#allocation2 + $0x58] sm:$0xff] %vm23, -1e+30
    %36 = vst.msk [vmem:[#allocation2 + $0x60] sm:$0xff] %vm23, -1e+30
    %37 = vst.msk [vmem:[#allocation2 + $0x68] sm:$0xff] %vm23, -1e+30
    %38 = vst.msk [vmem:[#allocation2 + $0x70] sm:$0xff] %vm23, -1e+30
    %39 = vst.msk [vmem:[#allocation2 + $0x78] sm:$0xff] %vm23, -1e+30
    %40 = vst.msk [vmem:[#allocation3] sm:$0xff] %vm23, 0.0
    %41 = vst.msk [vmem:[#allocation3 + $0x8] sm:$0xff] %vm23, 0.0
    %42 = vst.msk [vmem:[#allocation3 + $0x10] sm:$0xff] %vm23, 0.0
    %43 = vst.msk [vmem:[#allocation3 + $0x18] sm:$0xff] %vm23, 0.0
    %44 = vst.msk [vmem:[#allocation3 + $0x20] sm:$0xff] %vm23, 0.0
    %45 = vst.msk [vmem:[#allocation3 + $0x28] sm:$0xff] %vm23, 0.0
    %46 = vst.msk [vmem:[#allocation3 + $0x30] sm:$0xff] %vm23, 0.0
    %47 = vst.msk [vmem:[#allocation3 + $0x38] sm:$0xff] %vm23, 0.0
    %48 = vst.msk [vmem:[#allocation3 + $0x40] sm:$0xff] %vm23, 0.0
    %49 = vst.msk [vmem:[#allocation3 + $0x48] sm:$0xff] %vm23, 0.0
    %50 = vst.msk [vmem:[#allocation3 + $0x50] sm:$0xff] %vm23, 0.0
    %51 = vst.msk [vmem:[#allocation3 + $0x58] sm:$0xff] %vm23, 0.0
    %52 = vst.msk [vmem:[#allocation3 + $0x60] sm:$0xff] %vm23, 0.0
    %53 = vst.msk [vmem:[#allocation3 + $0x68] sm:$0xff] %vm23, 0.0
    %54 = vst.msk [vmem:[#allocation3 + $0x70] sm:$0xff] %vm23, 0.0
    %55 = vst.msk [vmem:[#allocation3 + $0x78] sm:$0xff] %vm23, 0.0
    %56 = vst.msk [vmem:[#allocation4] sm:$0xff] %vm23, 0.0
    %57 = vst.msk [vmem:[#allocation4 + $0x8] sm:$0xff] %vm23, 0.0
    %58 = vst.msk [vmem:[#allocation4 + $0x10] sm:$0xff] %vm23, 0.0
    %59 = vst.msk [vmem:[#allocation4 + $0x18] sm:$0xff] %vm23, 0.0
    %60 = vst.msk [vmem:[#allocation4 + $0x20] sm:$0xff] %vm23, 0.0
    %61 = vst.msk [vmem:[#allocation4 + $0x28] sm:$0xff] %vm23, 0.0
    %62 = vst.msk [vmem:[#allocation4 + $0x30] sm:$0xff] %vm23, 0.0
    %63 = vst.msk [vmem:[#allocation4 + $0x38] sm:$0xff] %vm23, 0.0
    %64 = vst.msk [vmem:[#allocation4 + $0x40] sm:$0xff] %vm23, 0.0
    %65 = vst.msk [vmem:[#allocation4 + $0x48] sm:$0xff] %vm23, 0.0
    %66 = vst.msk [vmem:[#allocation4 + $0x50] sm:$0xff] %vm23, 0.0
    %67 = vst.msk [vmem:[#allocation4 + $0x58] sm:$0xff] %vm23, 0.0
    %68 = vst.msk [vmem:[#allocation4 + $0x60] sm:$0xff] %vm23, 0.0
    %69 = vst.msk [vmem:[#allocation4 + $0x68] sm:$0xff] %vm23, 0.0
    %70 = vst.msk [vmem:[#allocation4 + $0x70] sm:$0xff] %vm23, 0.0
    %71 = vst.msk [vmem:[#allocation4 + $0x78] sm:$0xff] %vm23, 0.0
  $region21: #{graph_to_text_forward.3} parent=0 // pred_fallthru
    _
  %v72 = vld [vmem:[%s0] sm:$0xff]
  %v73 = vld [vmem:[%s0 + $0x8] sm:$0xff]
  %v74 = vld [vmem:[%s0 + $0x10] sm:$0xff]
  %v75 = vld [vmem:[%s0 + $0x18] sm:$0xff]
  %v76 = vld [vmem:[%s0 + $0x20] sm:$0xff]
  %v77 = vld [vmem:[%s0 + $0x28] sm:$0xff]
  %v78 = vld [vmem:[%s0 + $0x30] sm:$0xff]
  %v79 = vld [vmem:[%s0 + $0x38] sm:$0xff]
  %v80 = vld [vmem:[%s0 + $0x40] sm:$0xff]
  %v81 = vld [vmem:[%s0 + $0x48] sm:$0xff]
  %v82 = vld [vmem:[%s0 + $0x50] sm:$0xff]
  %v83 = vld [vmem:[%s0 + $0x58] sm:$0xff]
  %v84 = vld [vmem:[%s0 + $0x60] sm:$0xff]
  %v85 = vld [vmem:[%s0 + $0x68] sm:$0xff]
  %v86 = vld [vmem:[%s0 + $0x70] sm:$0xff]
  %v87 = vld [vmem:[%s0 + $0x78] sm:$0xff]
  %v88 = vld [vmem:[%s1] sm:$0x1]
  %v90 = vperm.slane %v88, 0
  %v92 = vadd.f32 %v72, %v90
  %v93 = vadd.f32 %v73, %v90
  %v94 = vadd.f32 %v74, %v90
  %v95 = vadd.f32 %v75, %v90
  %v96 = vadd.f32 %v76, %v90
  %v97 = vadd.f32 %v77, %v90
  %v98 = vadd.f32 %v78, %v90
  %v99 = vadd.f32 %v79, %v90
  %v100 = vadd.f32 %v80, %v90
  %v101 = vadd.f32 %v81, %v90
  %v102 = vadd.f32 %v82, %v90
  %v103 = vadd.f32 %v83, %v90
  %v104 = vadd.f32 %v84, %v90
  %v105 = vadd.f32 %v85, %v90
  %v106 = vadd.f32 %v86, %v90
  %v107 = vadd.f32 %v87, %v90
  %v108 = vpack.c.bf16 %v93, %v92
  %v109 = vpack.c.bf16 %v95, %v94
  %v110 = vpack.c.bf16 %v97, %v96
  %v111 = vpack.c.bf16 %v99, %v98
  %v112 = vpack.c.bf16 %v101, %v100
  %v113 = vpack.c.bf16 %v103, %v102
  %v114 = vpack.c.bf16 %v105, %v104
  %v115 = vpack.c.bf16 %v107, %v106
  %v116 = vld [vmem:[%s2] sm:$0xf]
  %v117 = vld [vmem:[%s2 + $0x4] sm:$0xf]
  %v118 = vld [vmem:[%s2 + $0x8] sm:$0xf]
  %v119 = vld [vmem:[%s2 + $0xc] sm:$0xf]
  %v120 = vld [vmem:[%s2 + $0x10] sm:$0xf]
  %v121 = vld [vmem:[%s2 + $0x14] sm:$0xf]
  %v122 = vld [vmem:[%s2 + $0x18] sm:$0xf]
  %v123 = vld [vmem:[%s2 + $0x1c] sm:$0xf]
  %v124 = vld [vmem:[%s2 + $0x20] sm:$0xf]
  %v125 = vld [vmem:[%s2 + $0x24] sm:$0xf]
  %v126 = vld [vmem:[%s2 + $0x28] sm:$0xf]
  %v127 = vld [vmem:[%s2 + $0x2c] sm:$0xf]
  %v128 = vld [vmem:[%s2 + $0x30] sm:$0xf]
  %v129 = vld [vmem:[%s2 + $0x34] sm:$0xf]
  %v130 = vld [vmem:[%s2 + $0x38] sm:$0xf]
  %v131 = vld [vmem:[%s2 + $0x3c] sm:$0xf]
  %v148 = vunpack.c.l.b16 %v116
  %v149 = vunpack.c.l.b16 %v117
  %v150 = vunpack.c.l.b16 %v118
  %v151 = vunpack.c.l.b16 %v119
  %v152 = vunpack.c.l.b16 %v120
  %v153 = vunpack.c.l.b16 %v121
  %v154 = vunpack.c.l.b16 %v122
  %v155 = vunpack.c.l.b16 %v123
  %v156 = vunpack.c.l.b16 %v124
  %v157 = vunpack.c.l.b16 %v125
  %v158 = vunpack.c.l.b16 %v126
  %v159 = vunpack.c.l.b16 %v127
  %v160 = vunpack.c.l.b16 %v128
  %v161 = vunpack.c.l.b16 %v129
  %v162 = vunpack.c.l.b16 %v130
  %v163 = vunpack.c.l.b16 %v131
  %v164 = vpack.c.b16 %v149, %v148
  %v165 = vpack.c.b16 %v151, %v150
  %v166 = vpack.c.b16 %v153, %v152
  %v167 = vpack.c.b16 %v155, %v154
  %v168 = vpack.c.b16 %v157, %v156
  %v169 = vpack.c.b16 %v159, %v158
  %v170 = vpack.c.b16 %v161, %v160
  %v171 = vpack.c.b16 %v163, %v162
  %180 = vmatpush.bf16.msra.mxu0 %v171
  %181 = vmatpush.bf16.msra.mxu0 %v170
  %182 = vmatpush.bf16.msra.mxu0 %v169
  %183 = vmatpush.bf16.msra.mxu0 %v168
  %184 = vmatpush.bf16.msra.mxu0 %v167
  %185 = vmatpush.bf16.msra.mxu0 %v166
  %186 = vmatpush.bf16.msra.mxu0 %v165
  %187 = vmatpush.bf16.msra.mxu0 %v164
  %188 = vmatmul.bf16.gmra.mxu0 %v108
  %v189 = vpop.f32.mrf.mxu0
  %v190 = vadd.f32 0.0, %v189
  %v191 = vpop.f32.mrf.mxu0
  %v192 = vadd.f32 0.0, %v191
  %193 = vmatmul.bf16.gmra.mxu0 %v109
  %v194 = vpop.f32.mrf.mxu0
  %v195 = vadd.f32 0.0, %v194
  %v196 = vpop.f32.mrf.mxu0
  %v197 = vadd.f32 0.0, %v196
  %198 = vmatmul.bf16.gmra.mxu0 %v110
  %v199 = vpop.f32.mrf.mxu0
  %v200 = vadd.f32 0.0, %v199
  %v201 = vpop.f32.mrf.mxu0
  %v202 = vadd.f32 0.0, %v201
  %203 = vmatmul.bf16.gmra.mxu0 %v111
  %v204 = vpop.f32.mrf.mxu0
  %v205 = vadd.f32 0.0, %v204
  %v206 = vpop.f32.mrf.mxu0
  %v207 = vadd.f32 0.0, %v206
  %208 = vmatmul.bf16.gmra.mxu0 %v112
  %v209 = vpop.f32.mrf.mxu0
  %v210 = vadd.f32 0.0, %v209
  %v211 = vpop.f32.mrf.mxu0
  %v212 = vadd.f32 0.0, %v211
  %213 = vmatmul.bf16.gmra.mxu0 %v113
  %v214 = vpop.f32.mrf.mxu0
  %v215 = vadd.f32 0.0, %v214
  %v216 = vpop.f32.mrf.mxu0
  %v217 = vadd.f32 0.0, %v216
  %218 = vmatmul.bf16.gmra.mxu0 %v114
  %v219 = vpop.f32.mrf.mxu0
  %v220 = vadd.f32 0.0, %v219
  %v221 = vpop.f32.mrf.mxu0
  %v222 = vadd.f32 0.0, %v221
  %223 = vmatmul.bf16.gmra.mxu0 %v115
  %v224 = vpop.f32.mrf.mxu0
  %v225 = vadd.f32 0.0, %v224
  %v226 = vpop.f32.mrf.mxu0
  %v227 = vadd.f32 0.0, %v226
  %228 = vdwg.mxu0
  %229 = vst [vmem:[%s4] sm:$0xff] %v190
  %230 = vst [vmem:[%s4 + $0x8] sm:$0xff] %v192
  %231 = vst [vmem:[%s4 + $0x10] sm:$0xff] %v195
  %232 = vst [vmem:[%s4 + $0x18] sm:$0xff] %v197
  %233 = vst [vmem:[%s4 + $0x20] sm:$0xff] %v200
  %234 = vst [vmem:[%s4 + $0x28] sm:$0xff] %v202
  %235 = vst [vmem:[%s4 + $0x30] sm:$0xff] %v205
  %236 = vst [vmem:[%s4 + $0x38] sm:$0xff] %v207
  %237 = vst [vmem:[%s4 + $0x40] sm:$0xff] %v210
  %238 = vst [vmem:[%s4 + $0x48] sm:$0xff] %v212
  %239 = vst [vmem:[%s4 + $0x50] sm:$0xff] %v215
  %240 = vst [vmem:[%s4 + $0x58] sm:$0xff] %v217
  %241 = vst [vmem:[%s4 + $0x60] sm:$0xff] %v220
  %242 = vst [vmem:[%s4 + $0x68] sm:$0xff] %v222
  %243 = vst [vmem:[%s4 + $0x70] sm:$0xff] %v225
  %244 = vst [vmem:[%s4 + $0x78] sm:$0xff] %v227
  %s245 = smul.u32 0, 128
  %v246 = vlaneseq
  %v247 = vand.u32 %v246, 127
  %v248 = vstv %s245
  %v249 = vadd.s32 %v248, %v247
  %vm250 = vcmp.lt.s32.totalorder %v249, 64
  %v251 = vsel %vm250, %v190, -1e+30
  %v252 = vsel %vm250, %v192, -1e+30
  %v253 = vsel %vm250, %v195, -1e+30
  %v254 = vsel %vm250, %v197, -1e+30
  %v255 = vsel %vm250, %v200, -1e+30
  %v256 = vsel %vm250, %v202, -1e+30
  %v257 = vsel %vm250, %v205, -1e+30
  %v258 = vsel %vm250, %v207, -1e+30
  %v259 = vsel %vm250, %v210, -1e+30
  %v260 = vsel %vm250, %v212, -1e+30
  %v261 = vsel %vm250, %v215, -1e+30
  %v262 = vsel %vm250, %v217, -1e+30
  %v263 = vsel %vm250, %v220, -1e+30
  %v264 = vsel %vm250, %v222, -1e+30
  %v265 = vsel %vm250, %v225, -1e+30
  %v266 = vsel %vm250, %v227, -1e+30
  %v267 = vld [vmem:[#allocation2] sm:$0xff]
  %v268 = vld [vmem:[#allocation2 + $0x8] sm:$0xff]
  %v269 = vld [vmem:[#allocation2 + $0x10] sm:$0xff]
  %v270 = vld [vmem:[#allocation2 + $0x18] sm:$0xff]
  %v271 = vld [vmem:[#allocation2 + $0x20] sm:$0xff]
  %v272 = vld [vmem:[#allocation2 + $0x28] sm:$0xff]
  %v273 = vld [vmem:[#allocation2 + $0x30] sm:$0xff]
  %v274 = vld [vmem:[#allocation2 + $0x38] sm:$0xff]
  %v275 = vld [vmem:[#allocation2 + $0x40] sm:$0xff]
  %v276 = vld [vmem:[#allocation2 + $0x48] sm:$0xff]
  %v277 = vld [vmem:[#allocation2 + $0x50] sm:$0xff]
  %v278 = vld [vmem:[#allocation2 + $0x58] sm:$0xff]
  %v279 = vld [vmem:[#allocation2 + $0x60] sm:$0xff]
  %v280 = vld [vmem:[#allocation2 + $0x68] sm:$0xff]
  %v281 = vld [vmem:[#allocation2 + $0x70] sm:$0xff]
  %v282 = vld [vmem:[#allocation2 + $0x78] sm:$0xff]
  %283 = vmax.xlane.f32.xlu0 %v251
  %v284 = vpop.xlane.xlu0 %283
  %285 = vmax.xlane.f32.xlu0 %v252
  %v286 = vpop.xlane.xlu0 %285
  %287 = vmax.xlane.f32.xlu0 %v253
  %v288 = vpop.xlane.xlu0 %287
  %289 = vmax.xlane.f32.xlu0 %v254
  %v290 = vpop.xlane.xlu0 %289
  %291 = vmax.xlane.f32.xlu0 %v255
  %v292 = vpop.xlane.xlu0 %291
  %293 = vmax.xlane.f32.xlu0 %v256
  %v294 = vpop.xlane.xlu0 %293
  %295 = vmax.xlane.f32.xlu0 %v257
  %v296 = vpop.xlane.xlu0 %295
  %297 = vmax.xlane.f32.xlu0 %v258
  %v298 = vpop.xlane.xlu0 %297
  %299 = vmax.xlane.f32.xlu0 %v259
  %v300 = vpop.xlane.xlu0 %299
  %301 = vmax.xlane.f32.xlu0 %v260
  %v302 = vpop.xlane.xlu0 %301
  %303 = vmax.xlane.f32.xlu0 %v261
  %v304 = vpop.xlane.xlu0 %303
  %305 = vmax.xlane.f32.xlu0 %v262
  %v306 = vpop.xlane.xlu0 %305
  %307 = vmax.xlane.f32.xlu0 %v263
  %v308 = vpop.xlane.xlu0 %307
  %309 = vmax.xlane.f32.xlu0 %v264
  %v310 = vpop.xlane.xlu0 %309
  %311 = vmax.xlane.f32.xlu0 %v265
  %v312 = vpop.xlane.xlu0 %311
  %313 = vmax.xlane.f32.xlu0 %v266
  %v314 = vpop.xlane.xlu0 %313
  %v315 = vmax.f32 %v267, %v284
  %v316 = vmax.f32 %v268, %v286
  %v317 = vmax.f32 %v269, %v288
  %v318 = vmax.f32 %v270, %v290
  %v319 = vmax.f32 %v271, %v292
  %v320 = vmax.f32 %v272, %v294
  %v321 = vmax.f32 %v273, %v296
  %v322 = vmax.f32 %v274, %v298
  %v323 = vmax.f32 %v275, %v300
  %v324 = vmax.f32 %v276, %v302
  %v325 = vmax.f32 %v277, %v304
  %v326 = vmax.f32 %v278, %v306
  %v327 = vmax.f32 %v279, %v308
  %v328 = vmax.f32 %v280, %v310
  %v329 = vmax.f32 %v281, %v312
  %v330 = vmax.f32 %v282, %v314
  %v331 = vsub.f32 %v267, %v315
  %v332 = vsub.f32 %v268, %v316
  %v333 = vsub.f32 %v269, %v317
  %v334 = vsub.f32 %v270, %v318
  %v335 = vsub.f32 %v271, %v319
  %v336 = vsub.f32 %v272, %v320
  %v337 = vsub.f32 %v273, %v321
  %v338 = vsub.f32 %v274, %v322
  %v339 = vsub.f32 %v275, %v323
  %v340 = vsub.f32 %v276, %v324
  %v341 = vsub.f32 %v277, %v325
  %v342 = vsub.f32 %v278, %v326
  %v343 = vsub.f32 %v279, %v327
  %v344 = vsub.f32 %v280, %v328
  %v345 = vsub.f32 %v281, %v329
  %v346 = vsub.f32 %v282, %v330
  %v347 = vmul.f32 %v331, 1.442695
  %v348 = vpow.pop %v347
  %v349 = vmul.f32 %v332, 1.442695
  %v350 = vpow.pop %v349
  %v351 = vmul.f32 %v333, 1.442695
  %v352 = vpow.pop %v351
  %v353 = vmul.f32 %v334, 1.442695
  %v354 = vpow.pop %v353
  %v355 = vmul.f32 %v335, 1.442695
  %v356 = vpow.pop %v355
  %v357 = vmul.f32 %v336, 1.442695
  %v358 = vpow.pop %v357
  %v359 = vmul.f32 %v337, 1.442695
  %v360 = vpow.pop %v359
  %v361 = vmul.f32 %v338, 1.442695
  %v362 = vpow.pop %v361
  %v363 = vmul.f32 %v339, 1.442695
  %v364 = vpow.pop %v363
  %v365 = vmul.f32 %v340, 1.442695
  %v366 = vpow.pop %v365
  %v367 = vmul.f32 %v341, 1.442695
  %v368 = vpow.pop %v367
  %v369 = vmul.f32 %v342, 1.442695
  %v370 = vpow.pop %v369
  %v371 = vmul.f32 %v343, 1.442695
  %v372 = vpow.pop %v371
  %v373 = vmul.f32 %v344, 1.442695
  %v374 = vpow.pop %v373
  %v375 = vmul.f32 %v345, 1.442695
  %v376 = vpow.pop %v375
  %v377 = vmul.f32 %v346, 1.442695
  %v378 = vpow.pop %v377
  %v379 = vld [vmem:[#allocation3] sm:$0xff]
  %v380 = vld [vmem:[#allocation3 + $0x8] sm:$0xff]
  %v381 = vld [vmem:[#allocation3 + $0x10] sm:$0xff]
  %v382 = vld [vmem:[#allocation3 + $0x18] sm:$0xff]
  %v383 = vld [vmem:[#allocation3 + $0x20] sm:$0xff]
  %v384 = vld [vmem:[#allocation3 + $0x28] sm:$0xff]
  %v385 = vld [vmem:[#allocation3 + $0x30] sm:$0xff]
  %v386 = vld [vmem:[#allocation3 + $0x38] sm:$0xff]
  %v387 = vld [vmem:[#allocation3 + $0x40] sm:$0xff]
  %v388 = vld [vmem:[#allocation3 + $0x48] sm:$0xff]
  %v389 = vld [vmem:[#allocation3 + $0x50] sm:$0xff]
  %v390 = vld [vmem:[#allocation3 + $0x58] sm:$0xff]
  %v391 = vld [vmem:[#allocation3 + $0x60] sm:$0xff]
  %v392 = vld [vmem:[#allocation3 + $0x68] sm:$0xff]
  %v393 = vld [vmem:[#allocation3 + $0x70] sm:$0xff]
  %v394 = vld [vmem:[#allocation3 + $0x78] sm:$0xff]
  %v395 = vmul.f32 %v348, %v379
  %v396 = vmul.f32 %v350, %v380
  %v397 = vmul.f32 %v352, %v381
  %v398 = vmul.f32 %v354, %v382
  %v399 = vmul.f32 %v356, %v383
  %v400 = vmul.f32 %v358, %v384
  %v401 = vmul.f32 %v360, %v385
  %v402 = vmul.f32 %v362, %v386
  %v403 = vmul.f32 %v364, %v387
  %v404 = vmul.f32 %v366, %v388
  %v405 = vmul.f32 %v368, %v389
  %v406 = vmul.f32 %v370, %v390
  %v407 = vmul.f32 %v372, %v391
  %v408 = vmul.f32 %v374, %v392
  %v409 = vmul.f32 %v376, %v393
  %v410 = vmul.f32 %v378, %v394
  %412 = vset.pattern.permute.xlu0 0
  %413 = vperm.xlu0 %412, %v315
  %v414 = vpop.permute.xlu0 %413
  %417 = vset.pattern.permute.xlu0 0
  %418 = vperm.xlu0 %417, %v316
  %v419 = vpop.permute.xlu0 %418
  %422 = vset.pattern.permute.xlu0 0
  %423 = vperm.xlu0 %422, %v317
  %v424 = vpop.permute.xlu0 %423
  %427 = vset.pattern.permute.xlu0 0
  %428 = vperm.xlu0 %427, %v318
  %v429 = vpop.permute.xlu0 %428
  %432 = vset.pattern.permute.xlu0 0
  %433 = vperm.xlu0 %432, %v319
  %v434 = vpop.permute.xlu0 %433
  %437 = vset.pattern.permute.xlu0 0
  %438 = vperm.xlu0 %437, %v320
  %v439 = vpop.permute.xlu0 %438
  %442 = vset.pattern.permute.xlu0 0
  %443 = vperm.xlu0 %442, %v321
  %v444 = vpop.permute.xlu0 %443
  %447 = vset.pattern.permute.xlu0 0
  %448 = vperm.xlu0 %447, %v322
  %v449 = vpop.permute.xlu0 %448
  %452 = vset.pattern.permute.xlu0 0
  %453 = vperm.xlu0 %452, %v323
  %v454 = vpop.permute.xlu0 %453
  %457 = vset.pattern.permute.xlu0 0
  %458 = vperm.xlu0 %457, %v324
  %v459 = vpop.permute.xlu0 %458
  %462 = vset.pattern.permute.xlu0 0
  %463 = vperm.xlu0 %462, %v325
  %v464 = vpop.permute.xlu0 %463
  %467 = vset.pattern.permute.xlu0 0
  %468 = vperm.xlu0 %467, %v326
  %v469 = vpop.permute.xlu0 %468
  %472 = vset.pattern.permute.xlu0 0
  %473 = vperm.xlu0 %472, %v327
  %v474 = vpop.permute.xlu0 %473
  %477 = vset.pattern.permute.xlu0 0
  %478 = vperm.xlu0 %477, %v328
  %v479 = vpop.permute.xlu0 %478
  %482 = vset.pattern.permute.xlu0 0
  %483 = vperm.xlu0 %482, %v329
  %v484 = vpop.permute.xlu0 %483
  %487 = vset.pattern.permute.xlu0 0
  %488 = vperm.xlu0 %487, %v330
  %v489 = vpop.permute.xlu0 %488
  %v491 = vsub.f32 %v251, %v414
  %v492 = vsub.f32 %v252, %v419
  %v493 = vsub.f32 %v253, %v424
  %v494 = vsub.f32 %v254, %v429
  %v495 = vsub.f32 %v255, %v434
  %v496 = vsub.f32 %v256, %v439
  %v497 = vsub.f32 %v257, %v444
  %v498 = vsub.f32 %v258, %v449
  %v499 = vsub.f32 %v259, %v454
  %v500 = vsub.f32 %v260, %v459
  %v501 = vsub.f32 %v261, %v464
  %v502 = vsub.f32 %v262, %v469
  %v503 = vsub.f32 %v263, %v474
  %v504 = vsub.f32 %v264, %v479
  %v505 = vsub.f32 %v265, %v484
  %v506 = vsub.f32 %v266, %v489
  %v507 = vmul.f32 %v491, 1.442695
  %v508 = vpow.pop %v507
  %v509 = vmul.f32 %v492, 1.442695
  %v510 = vpow.pop %v509
  %v511 = vmul.f32 %v493, 1.442695
  %v512 = vpow.pop %v511
  %v513 = vmul.f32 %v494, 1.442695
  %v514 = vpow.pop %v513
  %v515 = vmul.f32 %v495, 1.442695
  %v516 = vpow.pop %v515
  %v517 = vmul.f32 %v496, 1.442695
  %v518 = vpow.pop %v517
  %v519 = vmul.f32 %v497, 1.442695
  %v520 = vpow.pop %v519
  %v521 = vmul.f32 %v498, 1.442695
  %v522 = vpow.pop %v521
  %v523 = vmul.f32 %v499, 1.442695
  %v524 = vpow.pop %v523
  %v525 = vmul.f32 %v500, 1.442695
  %v526 = vpow.pop %v525
  %v527 = vmul.f32 %v501, 1.442695
  %v528 = vpow.pop %v527
  %v529 = vmul.f32 %v502, 1.442695
  %v530 = vpow.pop %v529
  %v531 = vmul.f32 %v503, 1.442695
  %v532 = vpow.pop %v531
  %v533 = vmul.f32 %v504, 1.442695
  %v534 = vpow.pop %v533
  %v535 = vmul.f32 %v505, 1.442695
  %v536 = vpow.pop %v535
  %v537 = vmul.f32 %v506, 1.442695
  %v538 = vpow.pop %v537
  %539 = vadd.xlane.f32.xlu0 %v508
  %v540 = vpop.xlane.xlu0 %539
  %541 = vadd.xlane.f32.xlu0 %v510
  %v542 = vpop.xlane.xlu0 %541
  %543 = vadd.xlane.f32.xlu0 %v512
  %v544 = vpop.xlane.xlu0 %543
  %545 = vadd.xlane.f32.xlu0 %v514
  %v546 = vpop.xlane.xlu0 %545
  %547 = vadd.xlane.f32.xlu0 %v516
  %v548 = vpop.xlane.xlu0 %547
  %549 = vadd.xlane.f32.xlu0 %v518
  %v550 = vpop.xlane.xlu0 %549
  %551 = vadd.xlane.f32.xlu0 %v520
  %v552 = vpop.xlane.xlu0 %551
  %553 = vadd.xlane.f32.xlu0 %v522
  %v554 = vpop.xlane.xlu0 %553
  %555 = vadd.xlane.f32.xlu0 %v524
  %v556 = vpop.xlane.xlu0 %555
  %557 = vadd.xlane.f32.xlu0 %v526
  %v558 = vpop.xlane.xlu0 %557
  %559 = vadd.xlane.f32.xlu0 %v528
  %v560 = vpop.xlane.xlu0 %559
  %561 = vadd.xlane.f32.xlu0 %v530
  %v562 = vpop.xlane.xlu0 %561
  %563 = vadd.xlane.f32.xlu0 %v532
  %v564 = vpop.xlane.xlu0 %563
  %565 = vadd.xlane.f32.xlu0 %v534
  %v566 = vpop.xlane.xlu0 %565
  %567 = vadd.xlane.f32.xlu0 %v536
  %v568 = vpop.xlane.xlu0 %567
  %569 = vadd.xlane.f32.xlu0 %v538
  %v570 = vpop.xlane.xlu0 %569
  %v571 = vadd.f32 %v395, %v540
  %v572 = vadd.f32 %v396, %v542
  %v573 = vadd.f32 %v397, %v544
  %v574 = vadd.f32 %v398, %v546
  %v575 = vadd.f32 %v399, %v548
  %v576 = vadd.f32 %v400, %v550
  %v577 = vadd.f32 %v401, %v552
  %v578 = vadd.f32 %v402, %v554
  %v579 = vadd.f32 %v403, %v556
  %v580 = vadd.f32 %v404, %v558
  %v581 = vadd.f32 %v405, %v560
  %v582 = vadd.f32 %v406, %v562
  %v583 = vadd.f32 %v407, %v564
  %v584 = vadd.f32 %v408, %v566
  %v585 = vadd.f32 %v409, %v568
  %v586 = vadd.f32 %v410, %v570
  %vm587 = vcmask 7168
  %588 = vst.msk [vmem:[#allocation3] sm:$0xff] %vm587, %v571
  %589 = vst.msk [vmem:[#allocation3 + $0x8] sm:$0xff] %vm587, %v572
  %590 = vst.msk [vmem:[#allocation3 + $0x10] sm:$0xff] %vm587, %v573
  %591 = vst.msk [vmem:[#allocation3 + $0x18] sm:$0xff] %vm587, %v574
  %592 = vst.msk [vmem:[#allocation3 + $0x20] sm:$0xff] %vm587, %v575
  %593 = vst.msk [vmem:[#allocation3 + $0x28] sm:$0xff] %vm587, %v576
  %594 = vst.msk [vmem:[#allocation3 + $0x30] sm:$0xff] %vm587, %v577
  %595 = vst.msk [vmem:[#allocation3 + $0x38] sm:$0xff] %vm587, %v578
  %596 = vst.msk [vmem:[#allocation3 + $0x40] sm:$0xff] %vm587, %v579
  %597 = vst.msk [vmem:[#allocation3 + $0x48] sm:$0xff] %vm587, %v580
  %598 = vst.msk [vmem:[#allocation3 + $0x50] sm:$0xff] %vm587, %v581
  %599 = vst.msk [vmem:[#allocation3 + $0x58] sm:$0xff] %vm587, %v582
  %600 = vst.msk [vmem:[#allocation3 + $0x60] sm:$0xff] %vm587, %v583
  %601 = vst.msk [vmem:[#allocation3 + $0x68] sm:$0xff] %vm587, %v584
  %602 = vst.msk [vmem:[#allocation3 + $0x70] sm:$0xff] %vm587, %v585
  %603 = vst.msk [vmem:[#allocation3 + $0x78] sm:$0xff] %vm587, %v586
  %604 = vst.msk [vmem:[#allocation2] sm:$0xff] %vm587, %v315
  %605 = vst.msk [vmem:[#allocation2 + $0x8] sm:$0xff] %vm587, %v316
  %606 = vst.msk [vmem:[#allocation2 + $0x10] sm:$0xff] %vm587, %v317
  %607 = vst.msk [vmem:[#allocation2 + $0x18] sm:$0xff] %vm587, %v318
  %608 = vst.msk [vmem:[#allocation2 + $0x20] sm:$0xff] %vm587, %v319
  %609 = vst.msk [vmem:[#allocation2 + $0x28] sm:$0xff] %vm587, %v320
  %610 = vst.msk [vmem:[#allocation2 + $0x30] sm:$0xff] %vm587, %v321
  %611 = vst.msk [vmem:[#allocation2 + $0x38] sm:$0xff] %vm587, %v322
  %612 = vst.msk [vmem:[#allocation2 + $0x40] sm:$0xff] %vm587, %v323
  %613 = vst.msk [vmem:[#allocation2 + $0x48] sm:$0xff] %vm587, %v324
  %614 = vst.msk [vmem:[#allocation2 + $0x50] sm:$0xff] %vm587, %v325
  %615 = vst.msk [vmem:[#allocation2 + $0x58] sm:$0xff] %vm587, %v326
  %616 = vst.msk [vmem:[#allocation2 + $0x60] sm:$0xff] %vm587, %v327
  %617 = vst.msk [vmem:[#allocation2 + $0x68] sm:$0xff] %vm587, %v328
  %618 = vst.msk [vmem:[#allocation2 + $0x70] sm:$0xff] %vm587, %v329
  %619 = vst.msk [vmem:[#allocation2 + $0x78] sm:$0xff] %vm587, %v330
  %v620 = vld [vmem:[%s3] sm:$0xff]
  %v621 = vld [vmem:[%s3 + $0x8] sm:$0xff]
  %v622 = vld [vmem:[%s3 + $0x10] sm:$0xff]
  %v623 = vld [vmem:[%s3 + $0x18] sm:$0xff]
  %v624 = vld [vmem:[%s3 + $0x20] sm:$0xff]
  %v625 = vld [vmem:[%s3 + $0x28] sm:$0xff]
  %v626 = vld [vmem:[%s3 + $0x30] sm:$0xff]
  %v627 = vld [vmem:[%s3 + $0x38] sm:$0xff]
  %v628 = vld [vmem:[%s3 + $0x40] sm:$0xff]
  %v629 = vld [vmem:[%s3 + $0x48] sm:$0xff]
  %v630 = vld [vmem:[%s3 + $0x50] sm:$0xff]
  %v631 = vld [vmem:[%s3 + $0x58] sm:$0xff]
  %v632 = vld [vmem:[%s3 + $0x60] sm:$0xff]
  %v633 = vld [vmem:[%s3 + $0x68] sm:$0xff]
  %v634 = vld [vmem:[%s3 + $0x70] sm:$0xff]
  %v635 = vld [vmem:[%s3 + $0x78] sm:$0xff]
  %636 = vset.pattern.permute.xlu0 0
  %637 = vperm.xlu0 %636, %v620
  %v638 = vpop.permute.xlu0 %637
  %639 = vset.pattern.permute.xlu0 0
  %640 = vperm.xlu0 %639, %v621
  %v641 = vpop.permute.xlu0 %640
  %642 = vset.pattern.permute.xlu0 0
  %643 = vperm.xlu0 %642, %v622
  %v644 = vpop.permute.xlu0 %643
  %645 = vset.pattern.permute.xlu0 0
  %646 = vperm.xlu0 %645, %v623
  %v647 = vpop.permute.xlu0 %646
  %648 = vset.pattern.permute.xlu0 0
  %649 = vperm.xlu0 %648, %v624
  %v650 = vpop.permute.xlu0 %649
  %651 = vset.pattern.permute.xlu0 0
  %652 = vperm.xlu0 %651, %v625
  %v653 = vpop.permute.xlu0 %652
  %654 = vset.pattern.permute.xlu0 0
  %655 = vperm.xlu0 %654, %v626
  %v656 = vpop.permute.xlu0 %655
  %657 = vset.pattern.permute.xlu0 0
  %658 = vperm.xlu0 %657, %v627
  %v659 = vpop.permute.xlu0 %658
  %660 = vset.pattern.permute.xlu0 0
  %661 = vperm.xlu0 %660, %v628
  %v662 = vpop.permute.xlu0 %661
  %663 = vset.pattern.permute.xlu0 0
  %664 = vperm.xlu0 %663, %v629
  %v665 = vpop.permute.xlu0 %664
  %666 = vset.pattern.permute.xlu0 0
  %667 = vperm.xlu0 %666, %v630
  %v668 = vpop.permute.xlu0 %667
  %669 = vset.pattern.permute.xlu0 0
  %670 = vperm.xlu0 %669, %v631
  %v671 = vpop.permute.xlu0 %670
  %672 = vset.pattern.permute.xlu0 0
  %673 = vperm.xlu0 %672, %v632
  %v674 = vpop.permute.xlu0 %673
  %675 = vset.pattern.permute.xlu0 0
  %676 = vperm.xlu0 %675, %v633
  %v677 = vpop.permute.xlu0 %676
  %678 = vset.pattern.permute.xlu0 0
  %679 = vperm.xlu0 %678, %v634
  %v680 = vpop.permute.xlu0 %679
  %681 = vset.pattern.permute.xlu0 0
  %682 = vperm.xlu0 %681, %v635
  %v683 = vpop.permute.xlu0 %682
  %vm684 = vcmp.eq.s32.totalorder %v249, %v638
  %vm685 = vcmp.eq.s32.totalorder %v249, %v641
  %vm686 = vcmp.eq.s32.totalorder %v249, %v644
  %vm687 = vcmp.eq.s32.totalorder %v249, %v647
  %vm688 = vcmp.eq.s32.totalorder %v249, %v650
  %vm689 = vcmp.eq.s32.totalorder %v249, %v653
  %vm690 = vcmp.eq.s32.totalorder %v249, %v656
  %vm691 = vcmp.eq.s32.totalorder %v249, %v659
  %vm692 = vcmp.eq.s32.totalorder %v249, %v662
  %vm693 = vcmp.eq.s32.totalorder %v249, %v665
  %vm694 = vcmp.eq.s32.totalorder %v249, %v668
  %vm695 = vcmp.eq.s32.totalorder %v249, %v671
  %vm696 = vcmp.eq.s32.totalorder %v249, %v674
  %vm697 = vcmp.eq.s32.totalorder %v249, %v677
  %vm698 = vcmp.eq.s32.totalorder %v249, %v680
  %vm699 = vcmp.eq.s32.totalorder %v249, %v683
  %v700 = vld [vmem:[#allocation4] sm:$0xff]
  %v701 = vld [vmem:[#allocation4 + $0x8] sm:$0xff]
  %v702 = vld [vmem:[#allocation4 + $0x10] sm:$0xff]
  %v703 = vld [vmem:[#allocation4 + $0x18] sm:$0xff]
  %v704 = vld [vmem:[#allocation4 + $0x20] sm:$0xff]
  %v705 = vld [vmem:[#allocation4 + $0x28] sm:$0xff]
  %v706 = vld [vmem:[#allocation4 + $0x30] sm:$0xff]
  %v707 = vld [vmem:[#allocation4 + $0x38] sm:$0xff]
  %v708 = vld [vmem:[#allocation4 + $0x40] sm:$0xff]
  %v709 = vld [vmem:[#allocation4 + $0x48] sm:$0xff]
  %v710 = vld [vmem:[#allocation4 + $0x50] sm:$0xff]
  %v711 = vld [vmem:[#allocation4 + $0x58] sm:$0xff]
  %v712 = vld [vmem:[#allocation4 + $0x60] sm:$0xff]
  %v713 = vld [vmem:[#allocation4 + $0x68] sm:$0xff]
  %v714 = vld [vmem:[#allocation4 + $0x70] sm:$0xff]
  %v715 = vld [vmem:[#allocation4 + $0x78] sm:$0xff]
  %v716 = vsel %vm684, %v190, 0.0
  %v717 = vsel %vm685, %v192, 0.0
  %v718 = vsel %vm686, %v195, 0.0
  %v719 = vsel %vm687, %v197, 0.0
  %v720 = vsel %vm688, %v200, 0.0
  %v721 = vsel %vm689, %v202, 0.0
  %v722 = vsel %vm690, %v205, 0.0
  %v723 = vsel %vm691, %v207, 0.0
  %v724 = vsel %vm692, %v210, 0.0
  %v725 = vsel %vm693, %v212, 0.0
  %v726 = vsel %vm694, %v215, 0.0
  %v727 = vsel %vm695, %v217, 0.0
  %v728 = vsel %vm696, %v220, 0.0
  %v729 = vsel %vm697, %v222, 0.0
  %v730 = vsel %vm698, %v225, 0.0
  %v731 = vsel %vm699, %v227, 0.0
  %732 = vadd.xlane.f32.xlu0 %v716
  %v733 = vpop.xlane.xlu0 %732
  %734 = vadd.xlane.f32.xlu0 %v717
  %v735 = vpop.xlane.xlu0 %734
  %736 = vadd.xlane.f32.xlu0 %v718
  %v737 = vpop.xlane.xlu0 %736
  %738 = vadd.xlane.f32.xlu0 %v719
  %v739 = vpop.xlane.xlu0 %738
  %740 = vadd.xlane.f32.xlu0 %v720
  %v741 = vpop.xlane.xlu0 %740
  %742 = vadd.xlane.f32.xlu0 %v721
  %v743 = vpop.xlane.xlu0 %742
  %744 = vadd.xlane.f32.xlu0 %v722
  %v745 = vpop.xlane.xlu0 %744
  %746 = vadd.xlane.f32.xlu0 %v723
  %v747 = vpop.xlane.xlu0 %746
  %748 = vadd.xlane.f32.xlu0 %v724
  %v749 = vpop.xlane.xlu0 %748
  %750 = vadd.xlane.f32.xlu0 %v725
  %v751 = vpop.xlane.xlu0 %750
  %752 = vadd.xlane.f32.xlu0 %v726
  %v753 = vpop.xlane.xlu0 %752
  %754 = vadd.xlane.f32.xlu0 %v727
  %v755 = vpop.xlane.xlu0 %754
  %756 = vadd.xlane.f32.xlu0 %v728
  %v757 = vpop.xlane.xlu0 %756
  %758 = vadd.xlane.f32.xlu0 %v729
  %v759 = vpop.xlane.xlu0 %758
  %760 = vadd.xlane.f32.xlu0 %v730
  %v761 = vpop.xlane.xlu0 %760
  %762 = vadd.xlane.f32.xlu0 %v731
  %v763 = vpop.xlane.xlu0 %762
  %v764 = vadd.f32 %v700, %v733
  %v765 = vadd.f32 %v701, %v735
  %v766 = vadd.f32 %v702, %v737
  %v767 = vadd.f32 %v703, %v739
  %v768 = vadd.f32 %v704, %v741
  %v769 = vadd.f32 %v705, %v743
  %v770 = vadd.f32 %v706, %v745
  %v771 = vadd.f32 %v707, %v747
  %v772 = vadd.f32 %v708, %v749
  %v773 = vadd.f32 %v709, %v751
  %v774 = vadd.f32 %v710, %v753
  %v775 = vadd.f32 %v711, %v755
  %v776 = vadd.f32 %v712, %v757
  %v777 = vadd.f32 %v713, %v759
  %v778 = vadd.f32 %v714, %v761
  %v779 = vadd.f32 %v715, %v763
  %780 = vst.msk [vmem:[#allocation4] sm:$0xff] %vm587, %v764
  %781 = vst.msk [vmem:[#allocation4 + $0x8] sm:$0xff] %vm587, %v765
  %782 = vst.msk [vmem:[#allocation4 + $0x10] sm:$0xff] %vm587, %v766
  %783 = vst.msk [vmem:[#allocation4 + $0x18] sm:$0xff] %vm587, %v767
  %784 = vst.msk [vmem:[#allocation4 + $0x20] sm:$0xff] %vm587, %v768
  %785 = vst.msk [vmem:[#allocation4 + $0x28] sm:$0xff] %vm587, %v769
  %786 = vst.msk [vmem:[#allocation4 + $0x30] sm:$0xff] %vm587, %v770
  %787 = vst.msk [vmem:[#allocation4 + $0x38] sm:$0xff] %vm587, %v771
  %788 = vst.msk [vmem:[#allocation4 + $0x40] sm:$0xff] %vm587, %v772
  %789 = vst.msk [vmem:[#allocation4 + $0x48] sm:$0xff] %vm587, %v773
  %790 = vst.msk [vmem:[#allocation4 + $0x50] sm:$0xff] %vm587, %v774
  %791 = vst.msk [vmem:[#allocation4 + $0x58] sm:$0xff] %vm587, %v775
  %792 = vst.msk [vmem:[#allocation4 + $0x60] sm:$0xff] %vm587, %v776
  %793 = vst.msk [vmem:[#allocation4 + $0x68] sm:$0xff] %vm587, %v777
  %794 = vst.msk [vmem:[#allocation4 + $0x70] sm:$0xff] %vm587, %v778
  %795 = vst.msk [vmem:[#allocation4 + $0x78] sm:$0xff] %vm587, %v779
  // Predicated region
  $region22: #{graph_to_text_forward.3} parent=0 // pred_check
    %p796 = pneg %p19
  $region23: #{graph_to_text_forward.3} parent=0 // pred_check_branch
    %798 = sbr.rel (%p796) target = $region25
  $region24: #{graph_to_text_forward.3} parent=0 // pred_region
    %v799 = vld [vmem:[#allocation2] sm:$0xff]
    %v800 = vld [vmem:[#allocation2 + $0x8] sm:$0xff]
    %v801 = vld [vmem:[#allocation2 + $0x10] sm:$0xff]
    %v802 = vld [vmem:[#allocation2 + $0x18] sm:$0xff]
    %v803 = vld [vmem:[#allocation2 + $0x20] sm:$0xff]
    %v804 = vld [vmem:[#allocation2 + $0x28] sm:$0xff]
    %v805 = vld [vmem:[#allocation2 + $0x30] sm:$0xff]
    %v806 = vld [vmem:[#allocation2 + $0x38] sm:$0xff]
    %v807 = vld [vmem:[#allocation2 + $0x40] sm:$0xff]
    %v808 = vld [vmem:[#allocation2 + $0x48] sm:$0xff]
    %v809 = vld [vmem:[#allocation2 + $0x50] sm:$0xff]
    %v810 = vld [vmem:[#allocation2 + $0x58] sm:$0xff]
    %v811 = vld [vmem:[#allocation2 + $0x60] sm:$0xff]
    %v812 = vld [vmem:[#allocation2 + $0x68] sm:$0xff]
    %v813 = vld [vmem:[#allocation2 + $0x70] sm:$0xff]
    %v814 = vld [vmem:[#allocation2 + $0x78] sm:$0xff]
    %v815 = vld [vmem:[#allocation3] sm:$0xff]
    %v816 = vld [vmem:[#allocation3 + $0x8] sm:$0xff]
    %v817 = vld [vmem:[#allocation3 + $0x10] sm:$0xff]
    %v818 = vld [vmem:[#allocation3 + $0x18] sm:$0xff]
    %v819 = vld [vmem:[#allocation3 + $0x20] sm:$0xff]
    %v820 = vld [vmem:[#allocation3 + $0x28] sm:$0xff]
    %v821 = vld [vmem:[#allocation3 + $0x30] sm:$0xff]
    %v822 = vld [vmem:[#allocation3 + $0x38] sm:$0xff]
    %v823 = vld [vmem:[#allocation3 + $0x40] sm:$0xff]
    %v824 = vld [vmem:[#allocation3 + $0x48] sm:$0xff]
    %v825 = vld [vmem:[#allocation3 + $0x50] sm:$0xff]
    %v826 = vld [vmem:[#allocation3 + $0x58] sm:$0xff]
    %v827 = vld [vmem:[#allocation3 + $0x60] sm:$0xff]
    %v828 = vld [vmem:[#allocation3 + $0x68] sm:$0xff]
    %v829 = vld [vmem:[#allocation3 + $0x70] sm:$0xff]
    %v830 = vld [vmem:[#allocation3 + $0x78] sm:$0xff]
    %v831 = vlog2.pop %v815
    %v832 = vmul.f32 %v831, 0.6931472
    %v833 = vlog2.pop %v816
    %v834 = vmul.f32 %v833, 0.6931472
    %v835 = vlog2.pop %v817
    %v836 = vmul.f32 %v835, 0.6931472
    %v837 = vlog2.pop %v818
    %v838 = vmul.f32 %v837, 0.6931472
    %v839 = vlog2.pop %v819
    %v840 = vmul.f32 %v839, 0.6931472
    %v841 = vlog2.pop %v820
    %v842 = vmul.f32 %v841, 0.6931472
    %v843 = vlog2.pop %v821
    %v844 = vmul.f32 %v843, 0.6931472
    %v845 = vlog2.pop %v822
    %v846 = vmul.f32 %v845, 0.6931472
    %v847 = vlog2.pop %v823
    %v848 = vmul.f32 %v847, 0.6931472
    %v849 = vlog2.pop %v824
    %v850 = vmul.f32 %v849, 0.6931472
    %v851 = vlog2.pop %v825
    %v852 = vmul.f32 %v851, 0.6931472
    %v853 = vlog2.pop %v826
    %v854 = vmul.f32 %v853, 0.6931472
    %v855 = vlog2.pop %v827
    %v856 = vmul.f32 %v855, 0.6931472
    %v857 = vlog2.pop %v828
    %v858 = vmul.f32 %v857, 0.6931472
    %v859 = vlog2.pop %v829
    %v860 = vmul.f32 %v859, 0.6931472
    %v861 = vlog2.pop %v830
    %v862 = vmul.f32 %v861, 0.6931472
    %v863 = vadd.f32 %v799, %v832
    %v864 = vadd.f32 %v800, %v834
    %v865 = vadd.f32 %v801, %v836
    %v866 = vadd.f32 %v802, %v838
    %v867 = vadd.f32 %v803, %v840
    %v868 = vadd.f32 %v804, %v842
    %v869 = vadd.f32 %v805, %v844
    %v870 = vadd.f32 %v806, %v846
    %v871 = vadd.f32 %v807, %v848
    %v872 = vadd.f32 %v808, %v850
    %v873 = vadd.f32 %v809, %v852
    %v874 = vadd.f32 %v810, %v854
    %v875 = vadd.f32 %v811, %v856
    %v876 = vadd.f32 %v812, %v858
    %v877 = vadd.f32 %v813, %v860
    %v878 = vadd.f32 %v814, %v862
    %v879 = vld [vmem:[#allocation4] sm:$0xff]
    %v880 = vld [vmem:[#allocation4 + $0x8] sm:$0xff]
    %v881 = vld [vmem:[#allocation4 + $0x10] sm:$0xff]
    %v882 = vld [vmem:[#allocation4 + $0x18] sm:$0xff]
    %v883 = vld [vmem:[#allocation4 + $0x20] sm:$0xff]
    %v884 = vld [vmem:[#allocation4 + $0x28] sm:$0xff]
    %v885 = vld [vmem:[#allocation4 + $0x30] sm:$0xff]
    %v886 = vld [vmem:[#allocation4 + $0x38] sm:$0xff]
    %v887 = vld [vmem:[#allocation4 + $0x40] sm:$0xff]
    %v888 = vld [vmem:[#allocation4 + $0x48] sm:$0xff]
    %v889 = vld [vmem:[#allocation4 + $0x50] sm:$0xff]
    %v890 = vld [vmem:[#allocation4 + $0x58] sm:$0xff]
    %v891 = vld [vmem:[#allocation4 + $0x60] sm:$0xff]
    %v892 = vld [vmem:[#allocation4 + $0x68] sm:$0xff]
    %v893 = vld [vmem:[#allocation4 + $0x70] sm:$0xff]
    %v894 = vld [vmem:[#allocation4 + $0x78] sm:$0xff]
    %v895 = vsub.f32 %v863, %v879
    %v896 = vsub.f32 %v864, %v880
    %v897 = vsub.f32 %v865, %v881
    %v898 = vsub.f32 %v866, %v882
    %v899 = vsub.f32 %v867, %v883
    %v900 = vsub.f32 %v868, %v884
    %v901 = vsub.f32 %v869, %v885
    %v902 = vsub.f32 %v870, %v886
    %v903 = vsub.f32 %v871, %v887
    %v904 = vsub.f32 %v872, %v888
    %v905 = vsub.f32 %v873, %v889
    %v906 = vsub.f32 %v874, %v890
    %v907 = vsub.f32 %v875, %v891
    %v908 = vsub.f32 %v876, %v892
    %v909 = vsub.f32 %v877, %v893
    %v910 = vsub.f32 %v878, %v894
    %911 = vst.msk [vmem:[%s5] sm:$0xff] %vm587, %v895
    %912 = vst.msk [vmem:[%s5 + $0x8] sm:$0xff] %vm587, %v896
    %913 = vst.msk [vmem:[%s5 + $0x10] sm:$0xff] %vm587, %v897
    %914 = vst.msk [vmem:[%s5 + $0x18] sm:$0xff] %vm587, %v898
    %915 = vst.msk [vmem:[%s5 + $0x20] sm:$0xff] %vm587, %v899
    %916 = vst.msk [vmem:[%s5 + $0x28] sm:$0xff] %vm587, %v900
    %917 = vst.msk [vmem:[%s5 + $0x30] sm:$0xff] %vm587, %v901
    %918 = vst.msk [vmem:[%s5 + $0x38] sm:$0xff] %vm587, %v902
    %919 = vst.msk [vmem:[%s5 + $0x40] sm:$0xff] %vm587, %v903
    %920 = vst.msk [vmem:[%s5 + $0x48] sm:$0xff] %vm587, %v904
    %921 = vst.msk [vmem:[%s5 + $0x50] sm:$0xff] %vm587, %v905
    %922 = vst.msk [vmem:[%s5 + $0x58] sm:$0xff] %vm587, %v906
    %923 = vst.msk [vmem:[%s5 + $0x60] sm:$0xff] %vm587, %v907
    %924 = vst.msk [vmem:[%s5 + $0x68] sm:$0xff] %vm587, %v908
    %925 = vst.msk [vmem:[%s5 + $0x70] sm:$0xff] %vm587, %v909
    %926 = vst.msk [vmem:[%s5 + $0x78] sm:$0xff] %vm587, %v910
  $region25: #{graph_to_text_forward.3} parent=0 // pred_fallthru
    _
  // Predicated region
  $region26: #{graph_to_text_forward.3} parent=0 // pred_check
    _
  $region27: #{graph_to_text_forward.3} parent=0 // pred_check_branch
    %928 = sbr.rel (0) target = $region29
  $region28: #{graph_to_text_forward.3} parent=0 // pred_region
    _
  $region29: #{graph_to_text_forward.3} parent=0 // pred_fallthru
    _
  // Predicated region
  $region30: #{graph_to_text_forward.3} parent=0 // pred_check
    _
  $region31: #{graph_to_text_forward.3} parent=0 // pred_check_branch
    %930 = sbr.rel (0) target = $region33
  $region32: #{graph_to_text_forward.3} parent=0 // pred_region
    _
  $region33: #{graph_to_text_forward.3} parent=0 // pred_fallthru
    _
  // Predicated region
  $region34: #{graph_to_text_forward.3} parent=0 // pred_check
    _
  $region35: #{graph_to_text_forward.3} parent=0 // pred_check_branch
    %932 = sbr.rel (0) target = $region37
  $region36: #{graph_to_text_forward.3} parent=0 // pred_region
    _
  $region37: #{graph_to_text_forward.3} parent=0 // pred_fallthru
    _
  // Predicated region
  $region38: #{graph_to_text_forward.3} parent=0 // pred_check
    _
  $region39: #{graph_to_text_forward.3} parent=0 // pred_check_branch
    %934 = sbr.rel (0) target = $region41
  $region40: #{graph_to_text_forward.3} parent=0 // pred_region
    _
  $region41: #{graph_to_text_forward.3} parent=0 // pred_fallthru
    _

</llo_original>
